<compile_context>
chip_gen: v6e
topology: v6e:2x2x1
jax: 0.10.0
libtpu: 0.0.40
codegen_flags: <defaults>
</compile_context>

<pallas_src>
import jax
import jax.numpy as jnp
from jax.experimental import pallas as pl

# ----------------------------- hyperparameters -----------------------------
BATCH = 8
INPUT_DIM = 32
EXPERT_NUM = 3
TASK_NUM = 3
EXPERT_DIMS = (64, 32)
TOWER_DIMS = (32, 16)
PCTR_EMB_DIM = 5  # nn.Linear(1, 5)

_PARAM_ORDER = (
    "we1", "be1", "we2", "be2",          # CTR/CVR experts (concat / block-diag)
    "wg", "bg",                          # both task gates (concat)
    "wt1", "bt1", "wt2", "bt2",          # both towers (block-diag)
    "wp", "bp",                          # both pred heads (block-structured)
    "wemb_rep", "bemb_rep", "rrep",      # pctr embedding (lane-replicated) + 0/1 repeat matrix
    "wce1", "bce1", "wce2", "bce2",      # conversion experts
    "wcg", "bcg",                        # conversion gate
    "wct1", "bct1", "wct2", "bct2",      # conversion tower
    "wcp", "bcp",                        # conversion pred head ([1,16] row + [1,1] bias)
)


# ------------------------------ fused kernel ------------------------------
def _fused_mmoe_kernel(
    x_ref,
    we1_ref, be1_ref, we2_ref, be2_ref,
    wg_ref, bg_ref,
    wt1_ref, bt1_ref, wt2_ref, bt2_ref,
    wp_ref, bp_ref,
    wemb_ref, bemb_ref, rrep_ref,
    wce1_ref, bce1_ref, wce2_ref, bce2_ref,
    wcg_ref, bcg_ref,
    wct1_ref, bct1_ref, wct2_ref, bct2_ref,
    wcp_ref, bcp_ref,
    preds_ref, taskfea_ref, tower1_ref, tower2_ref,
):
    f32 = jnp.float32
    De = EXPERT_DIMS[-1]

    def dense(h, w_ref, b_ref, relu=True):
        y = jnp.dot(h, w_ref[...], preferred_element_type=f32) + b_ref[...]
        return jnp.maximum(y, 0.0) if relu else y

    def softmax_lanes(logits):
        m = jnp.max(logits, axis=-1, keepdims=True)
        e = jnp.exp(logits - m)
        inv = pl.reciprocal(jnp.sum(e, axis=-1, keepdims=True), approx=True)
        return e * inv

    def gate_mix(p, fea_cat):
        # task_fea = sum_e p[:, e] * fea_e  (explicit 3-term VPU accumulation)
        acc = p[:, 0:1] * fea_cat[:, 0:De]
        for e in range(1, EXPERT_NUM):
            acc = acc + p[:, e:e + 1] * fea_cat[:, e * De:(e + 1) * De]
        return acc

    x = x_ref[...]                                            # [B, 32]

    # ---------------- CTR / CVR branch ----------------
    h1 = dense(x, we1_ref, be1_ref)                           # [B, 192]  all experts, layer 1
    fea = dense(h1, we2_ref, be2_ref)                         # [B,  96]  block-diag layer 2

    glog = dense(x, wg_ref, bg_ref, relu=False)               # [B, 6]  both task gates
    p0 = softmax_lanes(glog[:, 0:EXPERT_NUM])
    p1 = softmax_lanes(glog[:, EXPERT_NUM:2 * EXPERT_NUM])

    tf_cat = jnp.concatenate([gate_mix(p0, fea),
                              gate_mix(p1, fea)], axis=1)     # [B, 64]

    t1 = dense(tf_cat, wt1_ref, bt1_ref)                      # [B, 64]  both towers layer 1
    t2 = dense(t1, wt2_ref, bt2_ref)                          # [B, 32]  both towers layer 2

    preds01 = jax.nn.sigmoid(dense(t2, wp_ref, bp_ref, relu=False))  # [B, 2] = [pctr, pcvr]
    pctr = preds01[:, 0:1]                                    # (torch .detach(): forward-only here)

    # ---------------- conversion branch ----------------
    # lane-dense outer product: ait[b, d*5+p] = x[b, d] * (pctr[b]*Wemb[p] + bemb[p])
    er = pctr * wemb_ref[...] + bemb_ref[...]                 # [B, 160] embedding replicated on lanes
    xr = jnp.dot(x, rrep_ref[...], preferred_element_type=f32)  # [B, 160] = x[b, l // 5]
    ait = xr * er                                             # [B, 160]

    ch1 = dense(ait, wce1_ref, bce1_ref)                      # [B, 192]
    cfea = dense(ch1, wce2_ref, bce2_ref)                     # [B,  96]

    pc = softmax_lanes(dense(ait, wcg_ref, bcg_ref, relu=False))  # [B, 3]
    ctf = gate_mix(pc, cfea)                                  # [B, 32]

    ct1 = dense(ctf, wct1_ref, bct1_ref)                      # [B, 32]
    ct2 = dense(ct1, wct2_ref, bct2_ref)                      # [B, 16]

    pconv = jax.nn.sigmoid(
        jnp.sum(ct2 * wcp_ref[...], axis=-1, keepdims=True) + bcp_ref[...])  # [B, 1]

    # ---------------- lane-packed outputs ----------------
    preds_ref[...] = jnp.concatenate([preds01, pconv], axis=1)      # [B, 3]
    taskfea_ref[...] = jnp.concatenate([tf_cat, ctf], axis=1)       # [B, 96]
    tower1_ref[...] = jnp.concatenate([t1, ct1], axis=1)            # [B, 96]
    tower2_ref[...] = jnp.concatenate([t2, ct2], axis=1)            # [B, 48]


# ------------------------------ parameter init ------------------------------
def _init_linear(key, din, dout, scale=0.1):
    kw, kb = jax.random.split(key)
    w = scale * jax.random.normal(kw, (din, dout), jnp.float32)
    b = scale * jax.random.normal(kb, (1, dout), jnp.float32)
    return w, b


def _block_diag(blocks):
    din = sum(b.shape[0] for b in blocks)
    dout = sum(b.shape[1] for b in blocks)
    out = jnp.zeros((din, dout), jnp.float32)
    r = c = 0
    for b in blocks:
        out = out.at[r:r + b.shape[0], c:c + b.shape[1]].set(b)
        r += b.shape[0]
        c += b.shape[1]
    return out


def init_params(key):
    ks = jax.random.split(key, 16)
    p = {}

    # CTR/CVR experts (2 layers each), fused: layer1 concat, layer2 block-diagonal
    e_l1 = [_init_linear(jax.random.fold_in(ks[0], i), INPUT_DIM, EXPERT_DIMS[0])
            for i in range(EXPERT_NUM)]
    e_l2 = [_init_linear(jax.random.fold_in(ks[1], i), EXPERT_DIMS[0], EXPERT_DIMS[1])
            for i in range(EXPERT_NUM)]
    p["we1"] = jnp.concatenate([w for w, _ in e_l1], axis=1)          # [32, 192]
    p["be1"] = jnp.concatenate([b for _, b in e_l1], axis=1)          # [1, 192]
    p["we2"] = _block_diag([w for w, _ in e_l2])                      # [192, 96]
    p["be2"] = jnp.concatenate([b for _, b in e_l2], axis=1)          # [1, 96]

    # Both task gates fused
    gts = [_init_linear(jax.random.fold_in(ks[2], t), INPUT_DIM, EXPERT_NUM)
           for t in range(TASK_NUM - 1)]
    p["wg"] = jnp.concatenate([w for w, _ in gts], axis=1)            # [32, 6]
    p["bg"] = jnp.concatenate([b for _, b in gts], axis=1)            # [1, 6]

    # Both towers fused (block-diagonal)
    t_l1 = [_init_linear(jax.random.fold_in(ks[3], t), EXPERT_DIMS[-1], TOWER_DIMS[0])
            for t in range(TASK_NUM - 1)]
    t_l2 = [_init_linear(jax.random.fold_in(ks[4], t), TOWER_DIMS[0], TOWER_DIMS[1])
            for t in range(TASK_NUM - 1)]
    p["wt1"] = _block_diag([w for w, _ in t_l1])                      # [64, 64]
    p["bt1"] = jnp.concatenate([b for _, b in t_l1], axis=1)          # [1, 64]
    p["wt2"] = _block_diag([w for w, _ in t_l2])                      # [64, 32]
    p["bt2"] = jnp.concatenate([b for _, b in t_l2], axis=1)          # [1, 32]

    # Both prediction heads fused into a block-structured [32, 2] matmul
    heads = [_init_linear(jax.random.fold_in(ks[5], t), TOWER_DIMS[-1], 1)
             for t in range(TASK_NUM - 1)]
    p["wp"] = _block_diag([w for w, _ in heads])                      # [32, 2]
    p["bp"] = jnp.concatenate([b for _, b in heads], axis=1)          # [1, 2]

    # pctr embedding Linear(1,5): pre-replicate over lanes so er[b, d*5+p] = pctr*W[p] + b[p]
    wemb, bemb = _init_linear(ks[6], 1, PCTR_EMB_DIM)                 # [1,5], [1,5]
    p["wemb_rep"] = jnp.tile(wemb, (1, INPUT_DIM))                    # [1, 160]
    p["bemb_rep"] = jnp.tile(bemb, (1, INPUT_DIM))                    # [1, 160]

    # Constant 0/1 repeat matrix: (x @ rrep)[b, d*5+p] = x[b, d]
    lanes = INPUT_DIM * PCTR_EMB_DIM
    p["rrep"] = (jnp.arange(lanes)[None, :] // PCTR_EMB_DIM
                 == jnp.arange(INPUT_DIM)[:, None]).astype(jnp.float32)  # [32, 160]

    # Conversion experts (input dim 160), fused same way
    ce_l1 = [_init_linear(jax.random.fold_in(ks[7], i), lanes, EXPERT_DIMS[0])
             for i in range(EXPERT_NUM)]
    ce_l2 = [_init_linear(jax.random.fold_in(ks[8], i), EXPERT_DIMS[0], EXPERT_DIMS[1])
             for i in range(EXPERT_NUM)]
    p["wce1"] = jnp.concatenate([w for w, _ in ce_l1], axis=1)        # [160, 192]
    p["bce1"] = jnp.concatenate([b for _, b in ce_l1], axis=1)        # [1, 192]
    p["wce2"] = _block_diag([w for w, _ in ce_l2])                    # [192, 96]
    p["bce2"] = jnp.concatenate([b for _, b in ce_l2], axis=1)        # [1, 96]

    # Conversion gate / tower / pred head
    p["wcg"], p["bcg"] = _init_linear(ks[9], lanes, EXPERT_NUM)       # [160,3], [1,3]
    p["wct1"], p["bct1"] = _init_linear(ks[10], EXPERT_DIMS[-1], TOWER_DIMS[0])
    p["wct2"], p["bct2"] = _init_linear(ks[11], TOWER_DIMS[0], TOWER_DIMS[1])
    wcp, bcp = _init_linear(ks[12], TOWER_DIMS[-1], 1)
    p["wcp"] = wcp.T                                                  # [1, 16] (lane reduce)
    p["bcp"] = bcp                                                    # [1, 1]
    return p


# --------------------------------- forward ----------------------------------
@jax.jit
def forward(params, x):
    B = x.shape[0]
    De, Dt1, Dt2 = EXPERT_DIMS[-1], TOWER_DIMS[0], TOWER_DIMS[1]

    preds, task_cat, tw1_cat, tw2_cat = pl.pallas_call(
        _fused_mmoe_kernel,
        out_shape=(
            jax.ShapeDtypeStruct((B, TASK_NUM), jnp.float32),        # [pctr, pcvr, pconversion]
            jax.ShapeDtypeStruct((B, TASK_NUM * De), jnp.float32),   # task_fea (3 x 32)
            jax.ShapeDtypeStruct((B, TASK_NUM * Dt1), jnp.float32),  # tower layer-1 feats (3 x 32)
            jax.ShapeDtypeStruct((B, TASK_NUM * Dt2), jnp.float32),  # tower layer-2 feats (3 x 16)
        ),
    )(x, *(params[k] for k in _PARAM_ORDER))

    results = [preds[:, 0], preds[:, 1], preds[:, 2]]
    task_fea = [task_cat[:, t * De:(t + 1) * De] for t in range(TASK_NUM)]
    tower_fea = [[tw1_cat[:, t * Dt1:(t + 1) * Dt1],
                  tw2_cat[:, t * Dt2:(t + 1) * Dt2]] for t in range(TASK_NUM)]
    return results, task_fea, tower_fea


# ----------------------------------- main ------------------------------------
if __name__ == "__main__":
    key = jax.random.PRNGKey(0)
    kx, kp = jax.random.split(key)
    x = jax.random.normal(kx, (BATCH, INPUT_DIM), jnp.float32)  # [B, input_dim]
    params = init_params(kp)

    results, task_fea, tower_fea = forward(params, x)
    jax.block_until_ready((results, task_fea, tower_fea))

    assert all(r.shape == (BATCH,) for r in results)
    assert len(task_fea) == TASK_NUM
    assert all(t.shape == (BATCH, EXPERT_DIMS[-1]) for t in task_fea)
    assert len(tower_fea) == TASK_NUM
    assert all(tf[0].shape == (BATCH, TOWER_DIMS[0]) and tf[1].shape == (BATCH, TOWER_DIMS[1])
               for tf in tower_fea)
    print("KERNEL_OK")
</pallas_src>

<mosaic_0001>
module attributes {stable_mosaic.version = 11 : i64} {
  func.func @_fused_mmoe_kernel(%arg0: memref<8x32xf32, #tpu.memory_space<vmem>>, %arg1: memref<32x192xf32, #tpu.memory_space<vmem>>, %arg2: memref<1x192xf32, #tpu.memory_space<vmem>>, %arg3: memref<192x96xf32, #tpu.memory_space<vmem>>, %arg4: memref<1x96xf32, #tpu.memory_space<vmem>>, %arg5: memref<32x6xf32, #tpu.memory_space<vmem>>, %arg6: memref<1x6xf32, #tpu.memory_space<vmem>>, %arg7: memref<64x64xf32, #tpu.memory_space<vmem>>, %arg8: memref<1x64xf32, #tpu.memory_space<vmem>>, %arg9: memref<64x32xf32, #tpu.memory_space<vmem>>, %arg10: memref<1x32xf32, #tpu.memory_space<vmem>>, %arg11: memref<32x2xf32, #tpu.memory_space<vmem>>, %arg12: memref<1x2xf32, #tpu.memory_space<vmem>>, %arg13: memref<1x160xf32, #tpu.memory_space<vmem>>, %arg14: memref<1x160xf32, #tpu.memory_space<vmem>>, %arg15: memref<32x160xf32, #tpu.memory_space<vmem>>, %arg16: memref<160x192xf32, #tpu.memory_space<vmem>>, %arg17: memref<1x192xf32, #tpu.memory_space<vmem>>, %arg18: memref<192x96xf32, #tpu.memory_space<vmem>>, %arg19: memref<1x96xf32, #tpu.memory_space<vmem>>, %arg20: memref<160x3xf32, #tpu.memory_space<vmem>>, %arg21: memref<1x3xf32, #tpu.memory_space<vmem>>, %arg22: memref<32x32xf32, #tpu.memory_space<vmem>>, %arg23: memref<1x32xf32, #tpu.memory_space<vmem>>, %arg24: memref<32x16xf32, #tpu.memory_space<vmem>>, %arg25: memref<1x16xf32, #tpu.memory_space<vmem>>, %arg26: memref<1x16xf32, #tpu.memory_space<vmem>>, %arg27: memref<1x1xf32, #tpu.memory_space<vmem>>, %arg28: memref<8x3xf32, #tpu.memory_space<vmem>>, %arg29: memref<8x96xf32, #tpu.memory_space<vmem>>, %arg30: memref<8x96xf32, #tpu.memory_space<vmem>>, %arg31: memref<8x48xf32, #tpu.memory_space<vmem>>) attributes {dimension_semantics = [], scalar_prefetch = 0 : i64, scratch_operands = 0 : i64, tpu.core_type = #tpu.core_type<tc>} {
    %c0 = arith.constant 0 : index
    %c0_0 = arith.constant 0 : index
    %0 = vector.load %arg0[%c0, %c0_0] : memref<8x32xf32, #tpu.memory_space<vmem>>, vector<8x32xf32>
    %c0_1 = arith.constant 0 : index
    %c0_2 = arith.constant 0 : index
    %1 = vector.load %arg1[%c0_1, %c0_2] : memref<32x192xf32, #tpu.memory_space<vmem>>, vector<32x192xf32>
    %cst = arith.constant dense<0.000000e+00> : vector<8x192xf32>
    %2 = tpu.matmul %0, %1, %cst {dimension_numbers = #tpu.dot_dimension_numbers<[1], [0], [0], [1], [0, 0, 1, 1], [], []>} : vector<8x32xf32>, vector<32x192xf32>, vector<8x192xf32> -> vector<8x192xf32>
    %c0_3 = arith.constant 0 : index
    %c0_4 = arith.constant 0 : index
    %3 = vector.load %arg2[%c0_3, %c0_4] : memref<1x192xf32, #tpu.memory_space<vmem>>, vector<1x192xf32>
    %4 = vector.broadcast %3 : vector<1x192xf32> to vector<8x192xf32>
    %5 = arith.addf %2, %4 : vector<8x192xf32>
    %cst_5 = arith.constant 0.000000e+00 : f32
    %6 = vector.broadcast %cst_5 : f32 to vector<8x192xf32>
    %7 = arith.maximumf %5, %6 : vector<8x192xf32>
    %c0_6 = arith.constant 0 : index
    %c0_7 = arith.constant 0 : index
    %8 = vector.load %arg3[%c0_6, %c0_7] : memref<192x96xf32, #tpu.memory_space<vmem>>, vector<192x96xf32>
    %cst_8 = arith.constant dense<0.000000e+00> : vector<8x96xf32>
    %9 = tpu.matmul %7, %8, %cst_8 {dimension_numbers = #tpu.dot_dimension_numbers<[1], [0], [0], [1], [0, 0, 1, 1], [], []>} : vector<8x192xf32>, vector<192x96xf32>, vector<8x96xf32> -> vector<8x96xf32>
    %c0_9 = arith.constant 0 : index
    %c0_10 = arith.constant 0 : index
    %10 = vector.load %arg4[%c0_9, %c0_10] : memref<1x96xf32, #tpu.memory_space<vmem>>, vector<1x96xf32>
    %11 = vector.broadcast %10 : vector<1x96xf32> to vector<8x96xf32>
    %12 = arith.addf %9, %11 : vector<8x96xf32>
    %cst_11 = arith.constant 0.000000e+00 : f32
    %13 = vector.broadcast %cst_11 : f32 to vector<8x96xf32>
    %14 = arith.maximumf %12, %13 : vector<8x96xf32>
    %c0_12 = arith.constant 0 : index
    %c0_13 = arith.constant 0 : index
    %15 = vector.load %arg5[%c0_12, %c0_13] : memref<32x6xf32, #tpu.memory_space<vmem>>, vector<32x6xf32>
    %cst_14 = arith.constant dense<0.000000e+00> : vector<8x6xf32>
    %16 = tpu.matmul %0, %15, %cst_14 {dimension_numbers = #tpu.dot_dimension_numbers<[1], [0], [0], [1], [0, 0, 1, 1], [], []>} : vector<8x32xf32>, vector<32x6xf32>, vector<8x6xf32> -> vector<8x6xf32>
    %c0_15 = arith.constant 0 : index
    %c0_16 = arith.constant 0 : index
    %17 = vector.load %arg6[%c0_15, %c0_16] : memref<1x6xf32, #tpu.memory_space<vmem>>, vector<1x6xf32>
    %18 = vector.broadcast %17 : vector<1x6xf32> to vector<8x6xf32>
    %19 = arith.addf %16, %18 : vector<8x6xf32>
    %20 = vector.extract_strided_slice %19 {offsets = [0, 0], sizes = [8, 3], strides = [1, 1]} : vector<8x6xf32> to vector<8x3xf32>
    %cst_17 = arith.constant dense<0xFF800000> : vector<8xf32>
    %21 = vector.multi_reduction <maximumf>, %20, %cst_17 [1] : vector<8x3xf32> to vector<8xf32>
    %22 = vector.shape_cast %21 : vector<8xf32> to vector<8x1xf32>
    %23 = vector.broadcast %22 : vector<8x1xf32> to vector<8x3xf32>
    %24 = arith.subf %20, %23 : vector<8x3xf32>
    %25 = math.exp %24 : vector<8x3xf32>
    %cst_18 = arith.constant dense<0.000000e+00> : vector<8xf32>
    %26 = vector.multi_reduction <add>, %25, %cst_18 [1] : vector<8x3xf32> to vector<8xf32>
    %27 = vector.shape_cast %26 : vector<8xf32> to vector<8x1xf32>
    %28 = tpu.reciprocal %27 {approx = true} : vector<8x1xf32> -> vector<8x1xf32>
    %29 = vector.broadcast %28 : vector<8x1xf32> to vector<8x3xf32>
    %30 = arith.mulf %25, %29 : vector<8x3xf32>
    %31 = vector.extract_strided_slice %19 {offsets = [0, 3], sizes = [8, 3], strides = [1, 1]} : vector<8x6xf32> to vector<8x3xf32>
    %cst_19 = arith.constant dense<0xFF800000> : vector<8xf32>
    %32 = vector.multi_reduction <maximumf>, %31, %cst_19 [1] : vector<8x3xf32> to vector<8xf32>
    %33 = vector.shape_cast %32 : vector<8xf32> to vector<8x1xf32>
    %34 = vector.broadcast %33 : vector<8x1xf32> to vector<8x3xf32>
    %35 = arith.subf %31, %34 : vector<8x3xf32>
    %36 = math.exp %35 : vector<8x3xf32>
    %cst_20 = arith.constant dense<0.000000e+00> : vector<8xf32>
    %37 = vector.multi_reduction <add>, %36, %cst_20 [1] : vector<8x3xf32> to vector<8xf32>
    %38 = vector.shape_cast %37 : vector<8xf32> to vector<8x1xf32>
    %39 = tpu.reciprocal %38 {approx = true} : vector<8x1xf32> -> vector<8x1xf32>
    %40 = vector.broadcast %39 : vector<8x1xf32> to vector<8x3xf32>
    %41 = arith.mulf %36, %40 : vector<8x3xf32>
    %42 = vector.extract_strided_slice %30 {offsets = [0, 0], sizes = [8, 1], strides = [1, 1]} : vector<8x3xf32> to vector<8x1xf32>
    %43 = vector.extract_strided_slice %14 {offsets = [0, 0], sizes = [8, 32], strides = [1, 1]} : vector<8x96xf32> to vector<8x32xf32>
    %44 = vector.broadcast %42 : vector<8x1xf32> to vector<8x32xf32>
    %45 = arith.mulf %44, %43 : vector<8x32xf32>
    %46 = vector.extract_strided_slice %30 {offsets = [0, 1], sizes = [8, 1], strides = [1, 1]} : vector<8x3xf32> to vector<8x1xf32>
    %47 = vector.extract_strided_slice %14 {offsets = [0, 32], sizes = [8, 32], strides = [1, 1]} : vector<8x96xf32> to vector<8x32xf32>
    %48 = vector.broadcast %46 : vector<8x1xf32> to vector<8x32xf32>
    %49 = arith.mulf %48, %47 : vector<8x32xf32>
    %50 = arith.addf %45, %49 : vector<8x32xf32>
    %51 = vector.extract_strided_slice %30 {offsets = [0, 2], sizes = [8, 1], strides = [1, 1]} : vector<8x3xf32> to vector<8x1xf32>
    %52 = vector.extract_strided_slice %14 {offsets = [0, 64], sizes = [8, 32], strides = [1, 1]} : vector<8x96xf32> to vector<8x32xf32>
    %53 = vector.broadcast %51 : vector<8x1xf32> to vector<8x32xf32>
    %54 = arith.mulf %53, %52 : vector<8x32xf32>
    %55 = arith.addf %50, %54 : vector<8x32xf32>
    %56 = vector.extract_strided_slice %41 {offsets = [0, 0], sizes = [8, 1], strides = [1, 1]} : vector<8x3xf32> to vector<8x1xf32>
    %57 = vector.extract_strided_slice %14 {offsets = [0, 0], sizes = [8, 32], strides = [1, 1]} : vector<8x96xf32> to vector<8x32xf32>
    %58 = vector.broadcast %56 : vector<8x1xf32> to vector<8x32xf32>
    %59 = arith.mulf %58, %57 : vector<8x32xf32>
    %60 = vector.extract_strided_slice %41 {offsets = [0, 1], sizes = [8, 1], strides = [1, 1]} : vector<8x3xf32> to vector<8x1xf32>
    %61 = vector.extract_strided_slice %14 {offsets = [0, 32], sizes = [8, 32], strides = [1, 1]} : vector<8x96xf32> to vector<8x32xf32>
    %62 = vector.broadcast %60 : vector<8x1xf32> to vector<8x32xf32>
    %63 = arith.mulf %62, %61 : vector<8x32xf32>
    %64 = arith.addf %59, %63 : vector<8x32xf32>
    %65 = vector.extract_strided_slice %41 {offsets = [0, 2], sizes = [8, 1], strides = [1, 1]} : vector<8x3xf32> to vector<8x1xf32>
    %66 = vector.extract_strided_slice %14 {offsets = [0, 64], sizes = [8, 32], strides = [1, 1]} : vector<8x96xf32> to vector<8x32xf32>
    %67 = vector.broadcast %65 : vector<8x1xf32> to vector<8x32xf32>
    %68 = arith.mulf %67, %66 : vector<8x32xf32>
    %69 = arith.addf %64, %68 : vector<8x32xf32>
    %70 = tpu.concatenate %55, %69 in 1 : vector<8x32xf32>, vector<8x32xf32> -> vector<8x64xf32>
    %c0_21 = arith.constant 0 : index
    %c0_22 = arith.constant 0 : index
    %71 = vector.load %arg7[%c0_21, %c0_22] : memref<64x64xf32, #tpu.memory_space<vmem>>, vector<64x64xf32>
    %cst_23 = arith.constant dense<0.000000e+00> : vector<8x64xf32>
    %72 = tpu.matmul %70, %71, %cst_23 {dimension_numbers = #tpu.dot_dimension_numbers<[1], [0], [0], [1], [0, 0, 1, 1], [], []>} : vector<8x64xf32>, vector<64x64xf32>, vector<8x64xf32> -> vector<8x64xf32>
    %c0_24 = arith.constant 0 : index
    %c0_25 = arith.constant 0 : index
    %73 = vector.load %arg8[%c0_24, %c0_25] : memref<1x64xf32, #tpu.memory_space<vmem>>, vector<1x64xf32>
    %74 = vector.broadcast %73 : vector<1x64xf32> to vector<8x64xf32>
    %75 = arith.addf %72, %74 : vector<8x64xf32>
    %cst_26 = arith.constant 0.000000e+00 : f32
    %76 = vector.broadcast %cst_26 : f32 to vector<8x64xf32>
    %77 = arith.maximumf %75, %76 : vector<8x64xf32>
    %c0_27 = arith.constant 0 : index
    %c0_28 = arith.constant 0 : index
    %78 = vector.load %arg9[%c0_27, %c0_28] : memref<64x32xf32, #tpu.memory_space<vmem>>, vector<64x32xf32>
    %cst_29 = arith.constant dense<0.000000e+00> : vector<8x32xf32>
    %79 = tpu.matmul %77, %78, %cst_29 {dimension_numbers = #tpu.dot_dimension_numbers<[1], [0], [0], [1], [0, 0, 1, 1], [], []>} : vector<8x64xf32>, vector<64x32xf32>, vector<8x32xf32> -> vector<8x32xf32>
    %c0_30 = arith.constant 0 : index
    %c0_31 = arith.constant 0 : index
    %80 = vector.load %arg10[%c0_30, %c0_31] : memref<1x32xf32, #tpu.memory_space<vmem>>, vector<1x32xf32>
    %81 = vector.broadcast %80 : vector<1x32xf32> to vector<8x32xf32>
    %82 = arith.addf %79, %81 : vector<8x32xf32>
    %cst_32 = arith.constant 0.000000e+00 : f32
    %83 = vector.broadcast %cst_32 : f32 to vector<8x32xf32>
    %84 = arith.maximumf %82, %83 : vector<8x32xf32>
    %c0_33 = arith.constant 0 : index
    %c0_34 = arith.constant 0 : index
    %85 = vector.load %arg11[%c0_33, %c0_34] : memref<32x2xf32, #tpu.memory_space<vmem>>, vector<32x2xf32>
    %cst_35 = arith.constant dense<0.000000e+00> : vector<8x2xf32>
    %86 = tpu.matmul %84, %85, %cst_35 {dimension_numbers = #tpu.dot_dimension_numbers<[1], [0], [0], [1], [0, 0, 1, 1], [], []>} : vector<8x32xf32>, vector<32x2xf32>, vector<8x2xf32> -> vector<8x2xf32>
    %c0_36 = arith.constant 0 : index
    %c0_37 = arith.constant 0 : index
    %87 = vector.load %arg12[%c0_36, %c0_37] : memref<1x2xf32, #tpu.memory_space<vmem>>, vector<1x2xf32>
    %88 = vector.broadcast %87 : vector<1x2xf32> to vector<8x2xf32>
    %89 = arith.addf %86, %88 : vector<8x2xf32>
    %90 = arith.negf %89 : vector<8x2xf32>
    %91 = math.exp %90 : vector<8x2xf32>
    %cst_38 = arith.constant 1.000000e+00 : f32
    %92 = vector.broadcast %cst_38 : f32 to vector<8x2xf32>
    %93 = arith.addf %92, %91 : vector<8x2xf32>
    %94 = arith.divf %92, %93 : vector<8x2xf32>
    %95 = vector.extract_strided_slice %94 {offsets = [0, 0], sizes = [8, 1], strides = [1, 1]} : vector<8x2xf32> to vector<8x1xf32>
    %c0_39 = arith.constant 0 : index
    %c0_40 = arith.constant 0 : index
    %96 = vector.load %arg13[%c0_39, %c0_40] : memref<1x160xf32, #tpu.memory_space<vmem>>, vector<1x160xf32>
    %97 = vector.broadcast %95 : vector<8x1xf32> to vector<8x160xf32>
    %98 = vector.broadcast %96 : vector<1x160xf32> to vector<8x160xf32>
    %99 = arith.mulf %97, %98 : vector<8x160xf32>
    %c0_41 = arith.constant 0 : index
    %c0_42 = arith.constant 0 : index
    %100 = vector.load %arg14[%c0_41, %c0_42] : memref<1x160xf32, #tpu.memory_space<vmem>>, vector<1x160xf32>
    %101 = vector.broadcast %100 : vector<1x160xf32> to vector<8x160xf32>
    %102 = arith.addf %99, %101 : vector<8x160xf32>
    %c0_43 = arith.constant 0 : index
    %c0_44 = arith.constant 0 : index
    %103 = vector.load %arg15[%c0_43, %c0_44] : memref<32x160xf32, #tpu.memory_space<vmem>>, vector<32x160xf32>
    %cst_45 = arith.constant dense<0.000000e+00> : vector<8x160xf32>
    %104 = tpu.matmul %0, %103, %cst_45 {dimension_numbers = #tpu.dot_dimension_numbers<[1], [0], [0], [1], [0, 0, 1, 1], [], []>} : vector<8x32xf32>, vector<32x160xf32>, vector<8x160xf32> -> vector<8x160xf32>
    %105 = arith.mulf %104, %102 : vector<8x160xf32>
    %c0_46 = arith.constant 0 : index
    %c0_47 = arith.constant 0 : index
    %106 = vector.load %arg16[%c0_46, %c0_47] : memref<160x192xf32, #tpu.memory_space<vmem>>, vector<160x192xf32>
    %cst_48 = arith.constant dense<0.000000e+00> : vector<8x192xf32>
    %107 = tpu.matmul %105, %106, %cst_48 {dimension_numbers = #tpu.dot_dimension_numbers<[1], [0], [0], [1], [0, 0, 1, 1], [], []>} : vector<8x160xf32>, vector<160x192xf32>, vector<8x192xf32> -> vector<8x192xf32>
    %c0_49 = arith.constant 0 : index
    %c0_50 = arith.constant 0 : index
    %108 = vector.load %arg17[%c0_49, %c0_50] : memref<1x192xf32, #tpu.memory_space<vmem>>, vector<1x192xf32>
    %109 = vector.broadcast %108 : vector<1x192xf32> to vector<8x192xf32>
    %110 = arith.addf %107, %109 : vector<8x192xf32>
    %cst_51 = arith.constant 0.000000e+00 : f32
    %111 = vector.broadcast %cst_51 : f32 to vector<8x192xf32>
    %112 = arith.maximumf %110, %111 : vector<8x192xf32>
    %c0_52 = arith.constant 0 : index
    %c0_53 = arith.constant 0 : index
    %113 = vector.load %arg18[%c0_52, %c0_53] : memref<192x96xf32, #tpu.memory_space<vmem>>, vector<192x96xf32>
    %cst_54 = arith.constant dense<0.000000e+00> : vector<8x96xf32>
    %114 = tpu.matmul %112, %113, %cst_54 {dimension_numbers = #tpu.dot_dimension_numbers<[1], [0], [0], [1], [0, 0, 1, 1], [], []>} : vector<8x192xf32>, vector<192x96xf32>, vector<8x96xf32> -> vector<8x96xf32>
    %c0_55 = arith.constant 0 : index
    %c0_56 = arith.constant 0 : index
    %115 = vector.load %arg19[%c0_55, %c0_56] : memref<1x96xf32, #tpu.memory_space<vmem>>, vector<1x96xf32>
    %116 = vector.broadcast %115 : vector<1x96xf32> to vector<8x96xf32>
    %117 = arith.addf %114, %116 : vector<8x96xf32>
    %cst_57 = arith.constant 0.000000e+00 : f32
    %118 = vector.broadcast %cst_57 : f32 to vector<8x96xf32>
    %119 = arith.maximumf %117, %118 : vector<8x96xf32>
    %c0_58 = arith.constant 0 : index
    %c0_59 = arith.constant 0 : index
    %120 = vector.load %arg20[%c0_58, %c0_59] : memref<160x3xf32, #tpu.memory_space<vmem>>, vector<160x3xf32>
    %cst_60 = arith.constant dense<0.000000e+00> : vector<8x3xf32>
    %121 = tpu.matmul %105, %120, %cst_60 {dimension_numbers = #tpu.dot_dimension_numbers<[1], [0], [0], [1], [0, 0, 1, 1], [], []>} : vector<8x160xf32>, vector<160x3xf32>, vector<8x3xf32> -> vector<8x3xf32>
    %c0_61 = arith.constant 0 : index
    %c0_62 = arith.constant 0 : index
    %122 = vector.load %arg21[%c0_61, %c0_62] : memref<1x3xf32, #tpu.memory_space<vmem>>, vector<1x3xf32>
    %123 = vector.broadcast %122 : vector<1x3xf32> to vector<8x3xf32>
    %124 = arith.addf %121, %123 : vector<8x3xf32>
    %cst_63 = arith.constant dense<0xFF800000> : vector<8xf32>
    %125 = vector.multi_reduction <maximumf>, %124, %cst_63 [1] : vector<8x3xf32> to vector<8xf32>
    %126 = vector.shape_cast %125 : vector<8xf32> to vector<8x1xf32>
    %127 = vector.broadcast %126 : vector<8x1xf32> to vector<8x3xf32>
    %128 = arith.subf %124, %127 : vector<8x3xf32>
    %129 = math.exp %128 : vector<8x3xf32>
    %cst_64 = arith.constant dense<0.000000e+00> : vector<8xf32>
    %130 = vector.multi_reduction <add>, %129, %cst_64 [1] : vector<8x3xf32> to vector<8xf32>
    %131 = vector.shape_cast %130 : vector<8xf32> to vector<8x1xf32>
    %132 = tpu.reciprocal %131 {approx = true} : vector<8x1xf32> -> vector<8x1xf32>
    %133 = vector.broadcast %132 : vector<8x1xf32> to vector<8x3xf32>
    %134 = arith.mulf %129, %133 : vector<8x3xf32>
    %135 = vector.extract_strided_slice %134 {offsets = [0, 0], sizes = [8, 1], strides = [1, 1]} : vector<8x3xf32> to vector<8x1xf32>
    %136 = vector.extract_strided_slice %119 {offsets = [0, 0], sizes = [8, 32], strides = [1, 1]} : vector<8x96xf32> to vector<8x32xf32>
    %137 = vector.broadcast %135 : vector<8x1xf32> to vector<8x32xf32>
    %138 = arith.mulf %137, %136 : vector<8x32xf32>
    %139 = vector.extract_strided_slice %134 {offsets = [0, 1], sizes = [8, 1], strides = [1, 1]} : vector<8x3xf32> to vector<8x1xf32>
    %140 = vector.extract_strided_slice %119 {offsets = [0, 32], sizes = [8, 32], strides = [1, 1]} : vector<8x96xf32> to vector<8x32xf32>
    %141 = vector.broadcast %139 : vector<8x1xf32> to vector<8x32xf32>
    %142 = arith.mulf %141, %140 : vector<8x32xf32>
    %143 = arith.addf %138, %142 : vector<8x32xf32>
    %144 = vector.extract_strided_slice %134 {offsets = [0, 2], sizes = [8, 1], strides = [1, 1]} : vector<8x3xf32> to vector<8x1xf32>
    %145 = vector.extract_strided_slice %119 {offsets = [0, 64], sizes = [8, 32], strides = [1, 1]} : vector<8x96xf32> to vector<8x32xf32>
    %146 = vector.broadcast %144 : vector<8x1xf32> to vector<8x32xf32>
    %147 = arith.mulf %146, %145 : vector<8x32xf32>
    %148 = arith.addf %143, %147 : vector<8x32xf32>
    %c0_65 = arith.constant 0 : index
    %c0_66 = arith.constant 0 : index
    %149 = vector.load %arg22[%c0_65, %c0_66] : memref<32x32xf32, #tpu.memory_space<vmem>>, vector<32x32xf32>
    %cst_67 = arith.constant dense<0.000000e+00> : vector<8x32xf32>
    %150 = tpu.matmul %148, %149, %cst_67 {dimension_numbers = #tpu.dot_dimension_numbers<[1], [0], [0], [1], [0, 0, 1, 1], [], []>} : vector<8x32xf32>, vector<32x32xf32>, vector<8x32xf32> -> vector<8x32xf32>
    %c0_68 = arith.constant 0 : index
    %c0_69 = arith.constant 0 : index
    %151 = vector.load %arg23[%c0_68, %c0_69] : memref<1x32xf32, #tpu.memory_space<vmem>>, vector<1x32xf32>
    %152 = vector.broadcast %151 : vector<1x32xf32> to vector<8x32xf32>
    %153 = arith.addf %150, %152 : vector<8x32xf32>
    %cst_70 = arith.constant 0.000000e+00 : f32
    %154 = vector.broadcast %cst_70 : f32 to vector<8x32xf32>
    %155 = arith.maximumf %153, %154 : vector<8x32xf32>
    %c0_71 = arith.constant 0 : index
    %c0_72 = arith.constant 0 : index
    %156 = vector.load %arg24[%c0_71, %c0_72] : memref<32x16xf32, #tpu.memory_space<vmem>>, vector<32x16xf32>
    %cst_73 = arith.constant dense<0.000000e+00> : vector<8x16xf32>
    %157 = tpu.matmul %155, %156, %cst_73 {dimension_numbers = #tpu.dot_dimension_numbers<[1], [0], [0], [1], [0, 0, 1, 1], [], []>} : vector<8x32xf32>, vector<32x16xf32>, vector<8x16xf32> -> vector<8x16xf32>
    %c0_74 = arith.constant 0 : index
    %c0_75 = arith.constant 0 : index
    %158 = vector.load %arg25[%c0_74, %c0_75] : memref<1x16xf32, #tpu.memory_space<vmem>>, vector<1x16xf32>
    %159 = vector.broadcast %158 : vector<1x16xf32> to vector<8x16xf32>
    %160 = arith.addf %157, %159 : vector<8x16xf32>
    %cst_76 = arith.constant 0.000000e+00 : f32
    %161 = vector.broadcast %cst_76 : f32 to vector<8x16xf32>
    %162 = arith.maximumf %160, %161 : vector<8x16xf32>
    %c0_77 = arith.constant 0 : index
    %c0_78 = arith.constant 0 : index
    %163 = vector.load %arg26[%c0_77, %c0_78] : memref<1x16xf32, #tpu.memory_space<vmem>>, vector<1x16xf32>
    %164 = vector.broadcast %163 : vector<1x16xf32> to vector<8x16xf32>
    %165 = arith.mulf %162, %164 : vector<8x16xf32>
    %cst_79 = arith.constant dense<0.000000e+00> : vector<8xf32>
    %166 = vector.multi_reduction <add>, %165, %cst_79 [1] : vector<8x16xf32> to vector<8xf32>
    %167 = vector.shape_cast %166 : vector<8xf32> to vector<8x1xf32>
    %c0_80 = arith.constant 0 : index
    %c0_81 = arith.constant 0 : index
    %168 = vector.load %arg27[%c0_80, %c0_81] : memref<1x1xf32, #tpu.memory_space<vmem>>, vector<1x1xf32>
    %169 = vector.broadcast %168 : vector<1x1xf32> to vector<8x1xf32>
    %170 = arith.addf %167, %169 : vector<8x1xf32>
    %171 = arith.negf %170 : vector<8x1xf32>
    %172 = math.exp %171 : vector<8x1xf32>
    %cst_82 = arith.constant 1.000000e+00 : f32
    %173 = vector.broadcast %cst_82 : f32 to vector<8x1xf32>
    %174 = arith.addf %173, %172 : vector<8x1xf32>
    %175 = arith.divf %173, %174 : vector<8x1xf32>
    %176 = tpu.concatenate %94, %175 in 1 : vector<8x2xf32>, vector<8x1xf32> -> vector<8x3xf32>
    %c0_83 = arith.constant 0 : index
    %c0_84 = arith.constant 0 : index
    %177 = vector.load %arg28[%c0_83, %c0_84] : memref<8x3xf32, #tpu.memory_space<vmem>>, vector<8x3xf32>
    tpu.vector_store %arg28[%c0_83, %c0_84], %176 {strides = array<i32>} : memref<8x3xf32, #tpu.memory_space<vmem>>, vector<8x3xf32>,
    %178 = tpu.concatenate %70, %148 in 1 : vector<8x64xf32>, vector<8x32xf32> -> vector<8x96xf32>
    %c0_85 = arith.constant 0 : index
    %c0_86 = arith.constant 0 : index
    %179 = vector.load %arg29[%c0_85, %c0_86] : memref<8x96xf32, #tpu.memory_space<vmem>>, vector<8x96xf32>
    tpu.vector_store %arg29[%c0_85, %c0_86], %178 {strides = array<i32>} : memref<8x96xf32, #tpu.memory_space<vmem>>, vector<8x96xf32>,
    %180 = tpu.concatenate %77, %155 in 1 : vector<8x64xf32>, vector<8x32xf32> -> vector<8x96xf32>
    %c0_87 = arith.constant 0 : index
    %c0_88 = arith.constant 0 : index
    %181 = vector.load %arg30[%c0_87, %c0_88] : memref<8x96xf32, #tpu.memory_space<vmem>>, vector<8x96xf32>
    tpu.vector_store %arg30[%c0_87, %c0_88], %180 {strides = array<i32>} : memref<8x96xf32, #tpu.memory_space<vmem>>, vector<8x96xf32>,
    %182 = tpu.concatenate %84, %162 in 1 : vector<8x32xf32>, vector<8x16xf32> -> vector<8x48xf32>
    %c0_89 = arith.constant 0 : index
    %c0_90 = arith.constant 0 : index
    %183 = vector.load %arg31[%c0_89, %c0_90] : memref<8x48xf32, #tpu.memory_space<vmem>>, vector<8x48xf32>
    tpu.vector_store %arg31[%c0_89, %c0_90], %182 {strides = array<i32>} : memref<8x48xf32, #tpu.memory_space<vmem>>, vector<8x48xf32>,
    return
  }
}

</mosaic_0001>

<llo_original>
// kernel: forward.1
$region0: #{forward.1}
  #allocation0 [shape = 'u32[]', space=smem, size = 0x4, offset = 0x4, fixed_abs, tag = 'smem constant byte address 0x4 - core index']
  #allocation1 [shape = 'u32[144,128]{1,0:T(1,128)}', space=vmem, size = 0x12000, scoped, tag = 'internal scratch']
  #allocation2 [shape = 'f32[1,1]{1,0:T(1,128)S(1)}', space=vmem, size = 0x200, scoped, tag = 'scoped memory for forward.1']
  %s0 = inlined_call_operand.smem [shape: u32[32], index: -1, kind: input, shape index: {}]
  %s1 = sld [smem:[%s0]]
  %s2 = scalar_lea.smem %s0, 1
  %s3 = sld [smem:[%s2]]
  %s4 = scalar_lea.smem %s0, 2
  %s5 = sld [smem:[%s4]]
  %s6 = scalar_lea.smem %s0, 3
  %s7 = sld [smem:[%s6]]
  %s8 = scalar_lea.smem %s0, 4
  %s9 = sld [smem:[%s8]]
  %s10 = scalar_lea.smem %s0, 5
  %s11 = sld [smem:[%s10]]
  %s12 = scalar_lea.smem %s0, 6
  %s13 = sld [smem:[%s12]]
  %s14 = scalar_lea.smem %s0, 7
  %s15 = sld [smem:[%s14]]
  %s16 = scalar_lea.smem %s0, 8
  %s17 = sld [smem:[%s16]]
  %s18 = scalar_lea.smem %s0, 9
  %s19 = sld [smem:[%s18]]
  %s20 = scalar_lea.smem %s0, 10
  %s21 = sld [smem:[%s20]]
  %s22 = scalar_lea.smem %s0, 11
  %s23 = sld [smem:[%s22]]
  %s24 = scalar_lea.smem %s0, 12
  %s25 = sld [smem:[%s24]]
  %s26 = scalar_lea.smem %s0, 13
  %s27 = sld [smem:[%s26]]
  %s28 = scalar_lea.smem %s0, 14
  %s29 = sld [smem:[%s28]]
  %s30 = scalar_lea.smem %s0, 15
  %s31 = sld [smem:[%s30]]
  %s32 = scalar_lea.smem %s0, 16
  %s33 = sld [smem:[%s32]]
  %s34 = scalar_lea.smem %s0, 17
  %s35 = sld [smem:[%s34]]
  %s36 = scalar_lea.smem %s0, 18
  %s37 = sld [smem:[%s36]]
  %s38 = scalar_lea.smem %s0, 19
  %s39 = sld [smem:[%s38]]
  %s40 = scalar_lea.smem %s0, 20
  %s41 = sld [smem:[%s40]]
  %s42 = scalar_lea.smem %s0, 21
  %s43 = sld [smem:[%s42]]
  %s44 = scalar_lea.smem %s0, 22
  %s45 = sld [smem:[%s44]]
  %s46 = scalar_lea.smem %s0, 23
  %s47 = sld [smem:[%s46]]
  %s48 = scalar_lea.smem %s0, 24
  %s49 = sld [smem:[%s48]]
  %s50 = scalar_lea.smem %s0, 25
  %s51 = sld [smem:[%s50]]
  %s52 = scalar_lea.smem %s0, 26
  %s53 = sld [smem:[%s52]]
  %s54 = scalar_lea.smem %s0, 27
  %s55 = sld [smem:[%s54]]
  %s56 = scalar_lea.smem %s0, 28
  %s57 = sld [smem:[%s56]]
  %s58 = scalar_lea.smem %s0, 29
  %s59 = sld [smem:[%s58]]
  %s60 = scalar_lea.smem %s0, 30
  %s61 = sld [smem:[%s60]]
  %s62 = scalar_lea.smem %s0, 31
  %s63 = sld [smem:[%s62]]
  %64 = xla_tuple %s57, %s59, %s61, %s63
  %s65 = sld [smem:[#allocation0]]
  $region222: #{forward.1} parent=0
    _
  %s67 = ssub.s32 1, %s65
  %s68 = scalar_select 0, %s67, %s65
  %v69 = vstv %s55
  %70 = vst [vmem:[#allocation2] sm:$0x1] %v69
  $region1: #{forward.1} parent=0
    #allocation3 [shape = 'u8[1024]{0}', space=vmem, size = 0x400, scoped, tag = 'input window, operand 2, single buffered']
    #allocation4 [shape = 's32[1]{0}', space=sflag, size = 0x4, scoped, tag = 'scoped memory for forward.1']
    #allocation5 [shape = 'u8[98304]{0}', space=vmem, size = 0x18000, scoped, tag = 'input window, operand 3, single buffered']
    #allocation6 [shape = 's32[1]{0}', space=sflag, size = 0x4, scoped, tag = 'scoped memory for forward.1']
    #allocation7 [shape = 'u8[512]{0}', space=vmem, size = 0x400, scoped, tag = 'input window, operand 4, single buffered']
    #allocation8 [shape = 'u8[512]{0}', space=vmem, size = 0x400, scoped, tag = 'input window, operand 6, single buffered']
    #allocation9 [shape = 's32[1]{0}', space=sflag, size = 0x4, scoped, tag = 'scoped memory for forward.1']
    #allocation10 [shape = 'u8[32768]{0}', space=vmem, size = 0x8000, scoped, tag = 'input window, operand 7, single buffered']
    #allocation11 [shape = 'u8[512]{0}', space=vmem, size = 0x400, scoped, tag = 'input window, operand 8, single buffered']
    #allocation12 [shape = 's32[1]{0}', space=sflag, size = 0x4, scoped, tag = 'scoped memory for forward.1']
    #allocation13 [shape = 'u8[512]{0}', space=vmem, size = 0x400, scoped, tag = 'input window, operand 10, single buffered']
    #allocation14 [shape = 'u8[512]{0}', space=vmem, size = 0x400, scoped, tag = 'input window, operand 12, single buffered']
    #allocation15 [shape = 's32[1]{0}', space=sflag, size = 0x4, scoped, tag = 'scoped memory for forward.1']
    #allocation16 [shape = 'u8[1024]{0}', space=vmem, size = 0x400, scoped, tag = 'input window, operand 13, single buffered']
    #allocation17 [shape = 'u8[1024]{0}', space=vmem, size = 0x400, scoped, tag = 'input window, operand 14, single buffered']
    #allocation18 [shape = 's32[1]{0}', space=sflag, size = 0x4, scoped, tag = 'scoped memory for forward.1']
    #allocation19 [shape = 'u8[32768]{0}', space=vmem, size = 0x8000, scoped, tag = 'input window, operand 15, single buffered']
    #allocation20 [shape = 'u8[1024]{0}', space=vmem, size = 0x400, scoped, tag = 'input window, operand 17, single buffered']
    #allocation21 [shape = 's32[1]{0}', space=sflag, size = 0x4, scoped, tag = 'scoped memory for forward.1']
    #allocation22 [shape = 'u8[98304]{0}', space=vmem, size = 0x18000, scoped, tag = 'input window, operand 18, single buffered']
    #allocation23 [shape = 'u8[512]{0}', space=vmem, size = 0x400, scoped, tag = 'input window, operand 19, single buffered']
    #allocation24 [shape = 's32[1]{0}', space=sflag, size = 0x4, scoped, tag = 'scoped memory for forward.1']
    #allocation25 [shape = 'u8[512]{0}', space=vmem, size = 0x400, scoped, tag = 'input window, operand 21, single buffered']
    #allocation26 [shape = 'u8[16384]{0}', space=vmem, size = 0x4000, scoped, tag = 'input window, operand 22, single buffered']
    #allocation27 [shape = 's32[1]{0}', space=sflag, size = 0x4, scoped, tag = 'scoped memory for forward.1']
    #allocation28 [shape = 'u8[512]{0}', space=vmem, size = 0x400, scoped, tag = 'input window, operand 23, single buffered']
    #allocation29 [shape = 'u8[512]{0}', space=vmem, size = 0x400, scoped, tag = 'input window, operand 25, single buffered']
    #allocation30 [shape = 's32[1]{0}', space=sflag, size = 0x4, scoped, tag = 'scoped memory for forward.1']
    #allocation31 [shape = 'u8[512]{0}', space=vmem, size = 0x400, scoped, tag = 'input window, operand 26, single buffered']
    %71 = vsyncpa [#allocation4], 0
    %72 = vsyncpa [#allocation6], 0
    %73 = vsyncpa [#allocation9], 0
    %74 = vsyncpa [#allocation12], 0
    %75 = vsyncpa [#allocation15], 0
    %76 = vsyncpa [#allocation18], 0
    %77 = vsyncpa [#allocation21], 0
    %78 = vsyncpa [#allocation24], 0
    %79 = vsyncpa [#allocation27], 0
    %80 = vsyncpa [#allocation30], 0
    // Predicated region
    $region2: #{forward.1} parent=1 // pred_check
      _
    $region3: #{forward.1} parent=1 // pred_check_branch
      %82 = sbr.rel (0) target = $region5
    $region4: #{forward.1} parent=1 // pred_region
      _
    $region5: #{forward.1} parent=1 // pred_fallthru
      _
    // Predicated region
    $region6: #{forward.1} parent=1 // pred_check
      _
    $region7: #{forward.1} parent=1 // pred_check_branch
      %84 = sbr.rel (0) target = $region9
    $region8: #{forward.1} parent=1 // pred_region
      _
    $region9: #{forward.1} parent=1 // pred_fallthru
      _
    // Predicated region
    $region10: #{forward.1} parent=1 // pred_check
      _
    $region11: #{forward.1} parent=1 // pred_check_branch
      %86 = sbr.rel (0) target = $region13
    $region12: #{forward.1} parent=1 // pred_region
      %s88 = ssub.s32 32, 32
      %89 = vsyncadd [#allocation4], %s88
      %s91 = sshll.u32 [#allocation3], 4
      %s92 = int_to_ptr.vmem [resolvable:$true] %s91
      %94 = dma.hbm_to_vmem [thread:$0]  %s5, 32, %s92, [#allocation4]
    $region13: #{forward.1} parent=1 // pred_fallthru
      _
    // Predicated region
    $region14: #{forward.1} parent=1 // pred_check
      _
    $region15: #{forward.1} parent=1 // pred_check_branch
      %96 = sbr.rel (0) target = $region17
    $region16: #{forward.1} parent=1 // pred_region
      %s98 = ssub.s32 3072, 3072
      %99 = vsyncadd [#allocation6], %s98
      %s100 = sshll.u32 [#allocation5], 4
      %s101 = int_to_ptr.vmem [resolvable:$true] %s100
      %106 = dma.hbm_to_vmem [thread:$0]  %s7, 3072, %s101, [#allocation6], 128, 128, 8
    $region17: #{forward.1} parent=1 // pred_fallthru
      _
    // Predicated region
    $region18: #{forward.1} parent=1 // pred_check
      _
    $region19: #{forward.1} parent=1 // pred_check_branch
      %108 = sbr.rel (0) target = $region21
    $region20: #{forward.1} parent=1 // pred_region
      %s110 = ssub.s32 16, 16
      %111 = vsyncadd [#allocation6], %s110
      %s113 = sshll.u32 [#allocation7], 4
      %s114 = int_to_ptr.vmem [resolvable:$true] %s113
      %116 = dma.hbm_to_vmem [thread:$0]  %s9, 16, %s114, [#allocation6]
    $region21: #{forward.1} parent=1 // pred_fallthru
      _
    // Predicated region
    $region22: #{forward.1} parent=1 // pred_check
      _
    $region23: #{forward.1} parent=1 // pred_check_branch
      %118 = sbr.rel (0) target = $region25
    $region24: #{forward.1} parent=1 // pred_region
      _
    $region25: #{forward.1} parent=1 // pred_fallthru
      _
    // Predicated region
    $region26: #{forward.1} parent=1 // pred_check
      _
    $region27: #{forward.1} parent=1 // pred_check_branch
      %120 = sbr.rel (0) target = $region29
    $region28: #{forward.1} parent=1 // pred_region
      %s122 = ssub.s32 16, 16
      %123 = vsyncadd [#allocation9], %s122
      %s125 = sshll.u32 [#allocation8], 4
      %s126 = int_to_ptr.vmem [resolvable:$true] %s125
      %128 = dma.hbm_to_vmem [thread:$0]  %s13, 16, %s126, [#allocation9]
    $region29: #{forward.1} parent=1 // pred_fallthru
      _
    // Predicated region
    $region30: #{forward.1} parent=1 // pred_check
      _
    $region31: #{forward.1} parent=1 // pred_check_branch
      %130 = sbr.rel (0) target = $region33
    $region32: #{forward.1} parent=1 // pred_region
      %s132 = ssub.s32 1024, 1024
      %133 = vsyncadd [#allocation9], %s132
      %s134 = sshll.u32 [#allocation10], 4
      %s135 = int_to_ptr.vmem [resolvable:$true] %s134
      %140 = dma.hbm_to_vmem [thread:$0]  %s15, 1024, %s135, [#allocation9], 128, 128, 8
    $region33: #{forward.1} parent=1 // pred_fallthru
      _
    // Predicated region
    $region34: #{forward.1} parent=1 // pred_check
      _
    $region35: #{forward.1} parent=1 // pred_check_branch
      %142 = sbr.rel (0) target = $region37
    $region36: #{forward.1} parent=1 // pred_region
      %s144 = ssub.s32 16, 16
      %145 = vsyncadd [#allocation12], %s144
      %s147 = sshll.u32 [#allocation11], 4
      %s148 = int_to_ptr.vmem [resolvable:$true] %s147
      %150 = dma.hbm_to_vmem [thread:$0]  %s17, 16, %s148, [#allocation12]
    $region37: #{forward.1} parent=1 // pred_fallthru
      _
    // Predicated region
    $region38: #{forward.1} parent=1 // pred_check
      _
    $region39: #{forward.1} parent=1 // pred_check_branch
      %152 = sbr.rel (0) target = $region41
    $region40: #{forward.1} parent=1 // pred_region
      _
    $region41: #{forward.1} parent=1 // pred_fallthru
      _
    // Predicated region
    $region42: #{forward.1} parent=1 // pred_check
      _
    $region43: #{forward.1} parent=1 // pred_check_branch
      %154 = sbr.rel (0) target = $region45
    $region44: #{forward.1} parent=1 // pred_region
      %s156 = ssub.s32 16, 16
      %157 = vsyncadd [#allocation12], %s156
      %s159 = sshll.u32 [#allocation13], 4
      %s160 = int_to_ptr.vmem [resolvable:$true] %s159
      %162 = dma.hbm_to_vmem [thread:$0]  %s21, 16, %s160, [#allocation12]
    $region45: #{forward.1} parent=1 // pred_fallthru
      _
    // Predicated region
    $region46: #{forward.1} parent=1 // pred_check
      _
    $region47: #{forward.1} parent=1 // pred_check_branch
      %164 = sbr.rel (0) target = $region49
    $region48: #{forward.1} parent=1 // pred_region
      _
    $region49: #{forward.1} parent=1 // pred_fallthru
      _
    // Predicated region
    $region50: #{forward.1} parent=1 // pred_check
      _
    $region51: #{forward.1} parent=1 // pred_check_branch
      %166 = sbr.rel (0) target = $region53
    $region52: #{forward.1} parent=1 // pred_region
      %s168 = ssub.s32 16, 16
      %169 = vsyncadd [#allocation15], %s168
      %s171 = sshll.u32 [#allocation14], 4
      %s172 = int_to_ptr.vmem [resolvable:$true] %s171
      %174 = dma.hbm_to_vmem [thread:$0]  %s25, 16, %s172, [#allocation15]
    $region53: #{forward.1} parent=1 // pred_fallthru
      _
    // Predicated region
    $region54: #{forward.1} parent=1 // pred_check
      _
    $region55: #{forward.1} parent=1 // pred_check_branch
      %176 = sbr.rel (0) target = $region57
    $region56: #{forward.1} parent=1 // pred_region
      %s178 = ssub.s32 32, 32
      %179 = vsyncadd [#allocation15], %s178
      %s181 = sshll.u32 [#allocation16], 4
      %s182 = int_to_ptr.vmem [resolvable:$true] %s181
      %184 = dma.hbm_to_vmem [thread:$0]  %s27, 32, %s182, [#allocation15]
    $region57: #{forward.1} parent=1 // pred_fallthru
      _
    // Predicated region
    $region58: #{forward.1} parent=1 // pred_check
      _
    $region59: #{forward.1} parent=1 // pred_check_branch
      %186 = sbr.rel (0) target = $region61
    $region60: #{forward.1} parent=1 // pred_region
      %s188 = ssub.s32 32, 32
      %189 = vsyncadd [#allocation18], %s188
      %s191 = sshll.u32 [#allocation17], 4
      %s192 = int_to_ptr.vmem [resolvable:$true] %s191
      %194 = dma.hbm_to_vmem [thread:$0]  %s29, 32, %s192, [#allocation18]
    $region61: #{forward.1} parent=1 // pred_fallthru
      _
    // Predicated region
    $region62: #{forward.1} parent=1 // pred_check
      _
    $region63: #{forward.1} parent=1 // pred_check_branch
      %196 = sbr.rel (0) target = $region65
    $region64: #{forward.1} parent=1 // pred_region
      %s198 = ssub.s32 1024, 1024
      %199 = vsyncadd [#allocation18], %s198
      %s200 = sshll.u32 [#allocation19], 4
      %s201 = int_to_ptr.vmem [resolvable:$true] %s200
      %206 = dma.hbm_to_vmem [thread:$0]  %s31, 1024, %s201, [#allocation18], 256, 256, 16
    $region65: #{forward.1} parent=1 // pred_fallthru
      _
    // Predicated region
    $region66: #{forward.1} parent=1 // pred_check
      _
    $region67: #{forward.1} parent=1 // pred_check_branch
      %208 = sbr.rel (0) target = $region69
    $region68: #{forward.1} parent=1 // pred_region
      _
    $region69: #{forward.1} parent=1 // pred_fallthru
      _
    // Predicated region
    $region70: #{forward.1} parent=1 // pred_check
      _
    $region71: #{forward.1} parent=1 // pred_check_branch
      %210 = sbr.rel (0) target = $region73
    $region72: #{forward.1} parent=1 // pred_region
      %s212 = ssub.s32 32, 32
      %213 = vsyncadd [#allocation21], %s212
      %s215 = sshll.u32 [#allocation20], 4
      %s216 = int_to_ptr.vmem [resolvable:$true] %s215
      %218 = dma.hbm_to_vmem [thread:$0]  %s35, 32, %s216, [#allocation21]
    $region73: #{forward.1} parent=1 // pred_fallthru
      _
    // Predicated region
    $region74: #{forward.1} parent=1 // pred_check
      _
    $region75: #{forward.1} parent=1 // pred_check_branch
      %220 = sbr.rel (0) target = $region77
    $region76: #{forward.1} parent=1 // pred_region
      %s222 = ssub.s32 3072, 3072
      %223 = vsyncadd [#allocation21], %s222
      %s224 = sshll.u32 [#allocation22], 4
      %s225 = int_to_ptr.vmem [resolvable:$true] %s224
      %230 = dma.hbm_to_vmem [thread:$0]  %s37, 3072, %s225, [#allocation21], 128, 128, 8
    $region77: #{forward.1} parent=1 // pred_fallthru
      _
    // Predicated region
    $region78: #{forward.1} parent=1 // pred_check
      _
    $region79: #{forward.1} parent=1 // pred_check_branch
      %232 = sbr.rel (0) target = $region81
    $region80: #{forward.1} parent=1 // pred_region
      %s234 = ssub.s32 16, 16
      %235 = vsyncadd [#allocation24], %s234
      %s237 = sshll.u32 [#allocation23], 4
      %s238 = int_to_ptr.vmem [resolvable:$true] %s237
      %240 = dma.hbm_to_vmem [thread:$0]  %s39, 16, %s238, [#allocation24]
    $region81: #{forward.1} parent=1 // pred_fallthru
      _
    // Predicated region
    $region82: #{forward.1} parent=1 // pred_check
      _
    $region83: #{forward.1} parent=1 // pred_check_branch
      %242 = sbr.rel (0) target = $region85
    $region84: #{forward.1} parent=1 // pred_region
      _
    $region85: #{forward.1} parent=1 // pred_fallthru
      _
    // Predicated region
    $region86: #{forward.1} parent=1 // pred_check
      _
    $region87: #{forward.1} parent=1 // pred_check_branch
      %244 = sbr.rel (0) target = $region89
    $region88: #{forward.1} parent=1 // pred_region
      %s246 = ssub.s32 16, 16
      %247 = vsyncadd [#allocation24], %s246
      %s249 = sshll.u32 [#allocation25], 4
      %s250 = int_to_ptr.vmem [resolvable:$true] %s249
      %252 = dma.hbm_to_vmem [thread:$0]  %s43, 16, %s250, [#allocation24]
    $region89: #{forward.1} parent=1 // pred_fallthru
      _
    // Predicated region
    $region90: #{forward.1} parent=1 // pred_check
      _
    $region91: #{forward.1} parent=1 // pred_check_branch
      %254 = sbr.rel (0) target = $region93
    $region92: #{forward.1} parent=1 // pred_region
      %s256 = ssub.s32 512, 512
      %257 = vsyncadd [#allocation27], %s256
      %s258 = sshll.u32 [#allocation26], 4
      %s259 = int_to_ptr.vmem [resolvable:$true] %s258
      %264 = dma.hbm_to_vmem [thread:$0]  %s45, 512, %s259, [#allocation27], 128, 128, 8
    $region93: #{forward.1} parent=1 // pred_fallthru
      _
    // Predicated region
    $region94: #{forward.1} parent=1 // pred_check
      _
    $region95: #{forward.1} parent=1 // pred_check_branch
      %266 = sbr.rel (0) target = $region97
    $region96: #{forward.1} parent=1 // pred_region
      %s268 = ssub.s32 16, 16
      %269 = vsyncadd [#allocation27], %s268
      %s271 = sshll.u32 [#allocation28], 4
      %s272 = int_to_ptr.vmem [resolvable:$true] %s271
      %274 = dma.hbm_to_vmem [thread:$0]  %s47, 16, %s272, [#allocation27]
    $region97: #{forward.1} parent=1 // pred_fallthru
      _
    // Predicated region
    $region98: #{forward.1} parent=1 // pred_check
      _
    $region99: #{forward.1} parent=1 // pred_check_branch
      %276 = sbr.rel (0) target = $region101
    $region100: #{forward.1} parent=1 // pred_region
      _
    $region101: #{forward.1} parent=1 // pred_fallthru
      _
    // Predicated region
    $region102: #{forward.1} parent=1 // pred_check
      _
    $region103: #{forward.1} parent=1 // pred_check_branch
      %278 = sbr.rel (0) target = $region105
    $region104: #{forward.1} parent=1 // pred_region
      %s280 = ssub.s32 16, 16
      %281 = vsyncadd [#allocation30], %s280
      %s283 = sshll.u32 [#allocation29], 4
      %s284 = int_to_ptr.vmem [resolvable:$true] %s283
      %286 = dma.hbm_to_vmem [thread:$0]  %s51, 16, %s284, [#allocation30]
    $region105: #{forward.1} parent=1 // pred_fallthru
      _
    // Predicated region
    $region106: #{forward.1} parent=1 // pred_check
      _
    $region107: #{forward.1} parent=1 // pred_check_branch
      %288 = sbr.rel (0) target = $region109
    $region108: #{forward.1} parent=1 // pred_region
      %s290 = ssub.s32 16, 16
      %291 = vsyncadd [#allocation30], %s290
      %s293 = sshll.u32 [#allocation31], 4
      %s294 = int_to_ptr.vmem [resolvable:$true] %s293
      %296 = dma.hbm_to_vmem [thread:$0]  %s53, 16, %s294, [#allocation30]
    $region109: #{forward.1} parent=1 // pred_fallthru
      _
    // Predicated region
    $region110: #{forward.1} parent=1 // pred_check
      _
    $region111: #{forward.1} parent=1 // pred_check_branch
      %298 = sbr.rel (0) target = $region113
    $region112: #{forward.1} parent=1 // pred_region
      _
    $region113: #{forward.1} parent=1 // pred_fallthru
      _
    // Predicated region
    $region114: #{forward.1} parent=1 // pred_check
      _
    $region115: #{forward.1} parent=1 // pred_check_branch
      %300 = sbr.rel (0) target = $region117
    $region116: #{forward.1} parent=1 // pred_region
      %301 = dma.done [#allocation4], 32
    $region117: #{forward.1} parent=1 // pred_fallthru
      _
    // Predicated region
    $region118: #{forward.1} parent=1 // pred_check
      _
    $region119: #{forward.1} parent=1 // pred_check_branch
      %303 = sbr.rel (0) target = $region121
    $region120: #{forward.1} parent=1 // pred_region
      %304 = dma.done [#allocation6], 3072
    $region121: #{forward.1} parent=1 // pred_fallthru
      _
    // Predicated region
    $region122: #{forward.1} parent=1 // pred_check
      _
    $region123: #{forward.1} parent=1 // pred_check_branch
      %306 = sbr.rel (0) target = $region125
    $region124: #{forward.1} parent=1 // pred_region
      %307 = dma.done [#allocation6], 16
    $region125: #{forward.1} parent=1 // pred_fallthru
      _
    // Predicated region
    $region126: #{forward.1} parent=1 // pred_check
      _
    $region127: #{forward.1} parent=1 // pred_check_branch
      %309 = sbr.rel (0) target = $region129
    $region128: #{forward.1} parent=1 // pred_region
      %310 = dma.done [#allocation9], 16
    $region129: #{forward.1} parent=1 // pred_fallthru
      _
    // Predicated region
    $region130: #{forward.1} parent=1 // pred_check
      _
    $region131: #{forward.1} parent=1 // pred_check_branch
      %312 = sbr.rel (0) target = $region133
    $region132: #{forward.1} parent=1 // pred_region
      %313 = dma.done [#allocation9], 1024
    $region133: #{forward.1} parent=1 // pred_fallthru
      _
    // Predicated region
    $region134: #{forward.1} parent=1 // pred_check
      _
    $region135: #{forward.1} parent=1 // pred_check_branch
      %315 = sbr.rel (0) target = $region137
    $region136: #{forward.1} parent=1 // pred_region
      %316 = dma.done [#allocation12], 16
    $region137: #{forward.1} parent=1 // pred_fallthru
      _
    // Predicated region
    $region138: #{forward.1} parent=1 // pred_check
      _
    $region139: #{forward.1} parent=1 // pred_check_branch
      %318 = sbr.rel (0) target = $region141
    $region140: #{forward.1} parent=1 // pred_region
      %319 = dma.done [#allocation12], 16
    $region141: #{forward.1} parent=1 // pred_fallthru
      _
    // Predicated region
    $region142: #{forward.1} parent=1 // pred_check
      _
    $region143: #{forward.1} parent=1 // pred_check_branch
      %321 = sbr.rel (0) target = $region145
    $region144: #{forward.1} parent=1 // pred_region
      %322 = dma.done [#allocation15], 16
    $region145: #{forward.1} parent=1 // pred_fallthru
      _
    // Predicated region
    $region146: #{forward.1} parent=1 // pred_check
      _
    $region147: #{forward.1} parent=1 // pred_check_branch
      %324 = sbr.rel (0) target = $region149
    $region148: #{forward.1} parent=1 // pred_region
      %325 = dma.done [#allocation15], 32
    $region149: #{forward.1} parent=1 // pred_fallthru
      _
    // Predicated region
    $region150: #{forward.1} parent=1 // pred_check
      _
    $region151: #{forward.1} parent=1 // pred_check_branch
      %327 = sbr.rel (0) target = $region153
    $region152: #{forward.1} parent=1 // pred_region
      %328 = dma.done [#allocation18], 32
    $region153: #{forward.1} parent=1 // pred_fallthru
      _
    // Predicated region
    $region154: #{forward.1} parent=1 // pred_check
      _
    $region155: #{forward.1} parent=1 // pred_check_branch
      %330 = sbr.rel (0) target = $region157
    $region156: #{forward.1} parent=1 // pred_region
      %331 = dma.done [#allocation18], 1024
    $region157: #{forward.1} parent=1 // pred_fallthru
      _
    // Predicated region
    $region158: #{forward.1} parent=1 // pred_check
      _
    $region159: #{forward.1} parent=1 // pred_check_branch
      %333 = sbr.rel (0) target = $region161
    $region160: #{forward.1} parent=1 // pred_region
      %334 = dma.done [#allocation21], 32
    $region161: #{forward.1} parent=1 // pred_fallthru
      _
    // Predicated region
    $region162: #{forward.1} parent=1 // pred_check
      _
    $region163: #{forward.1} parent=1 // pred_check_branch
      %336 = sbr.rel (0) target = $region165
    $region164: #{forward.1} parent=1 // pred_region
      %337 = dma.done [#allocation21], 3072
    $region165: #{forward.1} parent=1 // pred_fallthru
      _
    // Predicated region
    $region166: #{forward.1} parent=1 // pred_check
      _
    $region167: #{forward.1} parent=1 // pred_check_branch
      %339 = sbr.rel (0) target = $region169
    $region168: #{forward.1} parent=1 // pred_region
      %340 = dma.done [#allocation24], 16
    $region169: #{forward.1} parent=1 // pred_fallthru
      _
    // Predicated region
    $region170: #{forward.1} parent=1 // pred_check
      _
    $region171: #{forward.1} parent=1 // pred_check_branch
      %342 = sbr.rel (0) target = $region173
    $region172: #{forward.1} parent=1 // pred_region
      %343 = dma.done [#allocation24], 16
    $region173: #{forward.1} parent=1 // pred_fallthru
      _
    // Predicated region
    $region174: #{forward.1} parent=1 // pred_check
      _
    $region175: #{forward.1} parent=1 // pred_check_branch
      %345 = sbr.rel (0) target = $region177
    $region176: #{forward.1} parent=1 // pred_region
      %346 = dma.done [#allocation27], 512
    $region177: #{forward.1} parent=1 // pred_fallthru
      _
    // Predicated region
    $region178: #{forward.1} parent=1 // pred_check
      _
    $region179: #{forward.1} parent=1 // pred_check_branch
      %348 = sbr.rel (0) target = $region181
    $region180: #{forward.1} parent=1 // pred_region
      %349 = dma.done [#allocation27], 16
    $region181: #{forward.1} parent=1 // pred_fallthru
      _
    // Predicated region
    $region182: #{forward.1} parent=1 // pred_check
      _
    $region183: #{forward.1} parent=1 // pred_check_branch
      %351 = sbr.rel (0) target = $region185
    $region184: #{forward.1} parent=1 // pred_region
      %352 = dma.done [#allocation30], 16
    $region185: #{forward.1} parent=1 // pred_fallthru
      _
    // Predicated region
    $region186: #{forward.1} parent=1 // pred_check
      _
    $region187: #{forward.1} parent=1 // pred_check_branch
      %354 = sbr.rel (0) target = $region189
    $region188: #{forward.1} parent=1 // pred_region
      %355 = dma.done [#allocation30], 16
    $region189: #{forward.1} parent=1 // pred_fallthru
      _
    %v356 = vld [vmem:[%s1] sm:$0xff]
    %v357 = vld [vmem:[%s3] sm:$0xff]
    %v358 = vld [vmem:[%s3 + $0x8] sm:$0xff]
    %v359 = vld [vmem:[%s3 + $0x10] sm:$0xff]
    %v360 = vld [vmem:[%s3 + $0x18] sm:$0xff]
    %v361 = vld [vmem:[%s3 + $0x20] sm:$0xff]
    %v362 = vld [vmem:[%s3 + $0x28] sm:$0xff]
    %v363 = vld [vmem:[%s3 + $0x30] sm:$0xff]
    %v364 = vld [vmem:[%s3 + $0x38] sm:$0xff]
    %v365 = vld [vmem:[#allocation3] sm:$0x3]
    %v367 = vlaneseq
    %v368 = vshrl.u32 %v367, 7
    %v369 = vsub.s32 0, %v368
    %v370 = vrot.slane %v365, %v369
    %v371 = vlaneseq
    %v372 = vshrl.u32 %v371, 7
    %v373 = vsub.s32 1, %v372
    %v374 = vrot.slane %v365, %v373
    %vm377 = vcmask 261120
    %v379 = vsel %vm377, %v356, 0
    %381 = vmatprep.subr.mxu0 0.0
    %382 = vmatpush1.msra.mxu0 0.0
    %383 = vmatprep.subr.mxu0 0.0
    %384 = vmatpush1.msra.mxu0 0.0
    %385 = vmatprep.subr.mxu0 0.0
    %386 = vmatpush1.msra.mxu0 0.0
    %387 = vmatprep.subr.mxu0 0.0
    %388 = vmatpush1.msra.mxu0 0.0
    %389 = vmatprep.subr.mxu0 0.0
    %390 = vmatpush1.msra.mxu0 0.0
    %391 = vmatprep.subr.mxu0 0.0
    %392 = vmatpush1.msra.mxu0 0.0
    %393 = vmatprep.subr.mxu0 0.0
    %394 = vmatpush1.msra.mxu0 0.0
    %395 = vmatprep.subr.mxu0 0.0
    %396 = vmatpush1.msra.mxu0 0.0
    %397 = vmatprep.subr.mxu0 0.0
    %398 = vmatpush1.msra.mxu0 0.0
    %399 = vmatprep.subr.mxu0 0.0
    %400 = vmatpush1.msra.mxu0 0.0
    %401 = vmatprep.subr.mxu0 0.0
    %402 = vmatpush1.msra.mxu0 0.0
    %403 = vmatprep.subr.mxu0 0.0
    %404 = vmatpush1.msra.mxu0 0.0
    %405 = vmatprep.subr.mxu0 %v364
    %406 = vmatpush1.msra.mxu0 %v363
    %407 = vmatprep.subr.mxu0 %v362
    %408 = vmatpush1.msra.mxu0 %v361
    %409 = vmatprep.subr.mxu0 %v360
    %410 = vmatpush1.msra.mxu0 %v359
    %411 = vmatprep.subr.mxu0 %v358
    %412 = vmatpush1.msra.mxu0 %v357
    %413 = vmatprep.subr.mxu0 0.0
    %414 = vmatpush2.msra.mxu0 0.0
    %415 = vmatprep.subr.mxu0 0.0
    %416 = vmatpush2.msra.mxu0 0.0
    %417 = vmatprep.subr.mxu0 0.0
    %418 = vmatpush2.msra.mxu0 0.0
    %419 = vmatprep.subr.mxu0 0.0
    %420 = vmatpush2.msra.mxu0 0.0
    %421 = vmatprep.subr.mxu0 0.0
    %422 = vmatpush2.msra.mxu0 0.0
    %423 = vmatprep.subr.mxu0 0.0
    %424 = vmatpush2.msra.mxu0 0.0
    %425 = vmatprep.subr.mxu0 0.0
    %426 = vmatpush2.msra.mxu0 0.0
    %427 = vmatprep.subr.mxu0 0.0
    %428 = vmatpush2.msra.mxu0 0.0
    %429 = vmatprep.subr.mxu0 0.0
    %430 = vmatpush2.msra.mxu0 0.0
    %431 = vmatprep.subr.mxu0 0.0
    %432 = vmatpush2.msra.mxu0 0.0
    %433 = vmatprep.subr.mxu0 0.0
    %434 = vmatpush2.msra.mxu0 0.0
    %435 = vmatprep.subr.mxu0 0.0
    %436 = vmatpush2.msra.mxu0 0.0
    %437 = vmatprep.subr.mxu0 0.0
    %438 = vmatpush2.msra.mxu0 0.0
    %439 = vmatprep.subr.mxu0 0.0
    %440 = vmatpush2.msra.mxu0 0.0
    %441 = vmatprep.subr.mxu0 0.0
    %442 = vmatpush2.msra.mxu0 0.0
    %443 = vmatprep.subr.mxu0 0.0
    %444 = vmatpush2.msra.mxu0 0.0
    %445 = vmatprep.mubr.f32.mxu0 0.0
    %446 = vmatmul.mubr.f32.gmra.mxu0 %v379
    %v447 = vpop.f32.mrf.mxu0
    %v448 = vadd.f32 %v370, %v447
    %v449 = vpop.f32.mrf.mxu0
    %v450 = vadd.f32 %v374, %v449
    %451 = vdwg.mxu0
    %v452 = vmax.f32 %v448, 0.0
    %v453 = vmax.f32 %v450, 0.0
    %v454 = vld [vmem:[#allocation5] sm:$0xff]
    %v455 = vld [vmem:[#allocation5 + $0x8] sm:$0xff]
    %v456 = vld [vmem:[#allocation5 + $0x10] sm:$0xff]
    %v457 = vld [vmem:[#allocation5 + $0x18] sm:$0xff]
    %v458 = vld [vmem:[#allocation5 + $0x20] sm:$0xff]
    %v459 = vld [vmem:[#allocation5 + $0x28] sm:$0xff]
    %v460 = vld [vmem:[#allocation5 + $0x30] sm:$0xff]
    %v461 = vld [vmem:[#allocation5 + $0x38] sm:$0xff]
    %v462 = vld [vmem:[#allocation5 + $0x40] sm:$0xff]
    %v463 = vld [vmem:[#allocation5 + $0x48] sm:$0xff]
    %v464 = vld [vmem:[#allocation5 + $0x50] sm:$0xff]
    %v465 = vld [vmem:[#allocation5 + $0x58] sm:$0xff]
    %v466 = vld [vmem:[#allocation5 + $0x60] sm:$0xff]
    %v467 = vld [vmem:[#allocation5 + $0x68] sm:$0xff]
    %v468 = vld [vmem:[#allocation5 + $0x70] sm:$0xff]
    %v469 = vld [vmem:[#allocation5 + $0x78] sm:$0xff]
    %v470 = vld [vmem:[#allocation5 + $0x80] sm:$0xff]
    %v471 = vld [vmem:[#allocation5 + $0x88] sm:$0xff]
    %v472 = vld [vmem:[#allocation5 + $0x90] sm:$0xff]
    %v473 = vld [vmem:[#allocation5 + $0x98] sm:$0xff]
    %v474 = vld [vmem:[#allocation5 + $0xa0] sm:$0xff]
    %v475 = vld [vmem:[#allocation5 + $0xa8] sm:$0xff]
    %v476 = vld [vmem:[#allocation5 + $0xb0] sm:$0xff]
    %v477 = vld [vmem:[#allocation5 + $0xb8] sm:$0xff]
    %v478 = vld [vmem:[#allocation7] sm:$0x1]
    %v480 = vlaneseq
    %v481 = vshrl.u32 %v480, 7
    %v482 = vsub.s32 0, %v481
    %v483 = vrot.slane %v478, %v482
    %vm485 = vcmask 523264
    %v487 = vsel %vm485, %v453, 0
    %489 = vmatprep.subr.mxu0 0.0
    %490 = vmatpush1.msra.mxu0 %v469
    %491 = vmatprep.subr.mxu0 0.0
    %492 = vmatpush1.msra.mxu0 %v468
    %493 = vmatprep.subr.mxu0 0.0
    %494 = vmatpush1.msra.mxu0 %v467
    %495 = vmatprep.subr.mxu0 0.0
    %496 = vmatpush1.msra.mxu0 %v466
    %497 = vmatprep.subr.mxu0 0.0
    %498 = vmatpush1.msra.mxu0 %v465
    %499 = vmatprep.subr.mxu0 0.0
    %500 = vmatpush1.msra.mxu0 %v464
    %501 = vmatprep.subr.mxu0 0.0
    %502 = vmatpush1.msra.mxu0 %v463
    %503 = vmatprep.subr.mxu0 0.0
    %504 = vmatpush1.msra.mxu0 %v462
    %505 = vmatprep.subr.mxu0 0.0
    %506 = vmatpush1.msra.mxu0 %v461
    %507 = vmatprep.subr.mxu0 0.0
    %508 = vmatpush1.msra.mxu0 %v460
    %509 = vmatprep.subr.mxu0 0.0
    %510 = vmatpush1.msra.mxu0 %v459
    %511 = vmatprep.subr.mxu0 0.0
    %512 = vmatpush1.msra.mxu0 %v458
    %513 = vmatprep.subr.mxu0 0.0
    %514 = vmatpush1.msra.mxu0 %v457
    %515 = vmatprep.subr.mxu0 0.0
    %516 = vmatpush1.msra.mxu0 %v456
    %517 = vmatprep.subr.mxu0 0.0
    %518 = vmatpush1.msra.mxu0 %v455
    %519 = vmatprep.subr.mxu0 0.0
    %520 = vmatpush1.msra.mxu0 %v454
    %521 = vmatprep.subr.mxu0 0.0
    %522 = vmatpush2.msra.mxu0 0.0
    %523 = vmatprep.subr.mxu0 0.0
    %524 = vmatpush2.msra.mxu0 0.0
    %525 = vmatprep.subr.mxu0 0.0
    %526 = vmatpush2.msra.mxu0 0.0
    %527 = vmatprep.subr.mxu0 0.0
    %528 = vmatpush2.msra.mxu0 0.0
    %529 = vmatprep.subr.mxu0 0.0
    %530 = vmatpush2.msra.mxu0 0.0
    %531 = vmatprep.subr.mxu0 0.0
    %532 = vmatpush2.msra.mxu0 0.0
    %533 = vmatprep.subr.mxu0 0.0
    %534 = vmatpush2.msra.mxu0 0.0
    %535 = vmatprep.subr.mxu0 0.0
    %536 = vmatpush2.msra.mxu0 0.0
    %537 = vmatprep.subr.mxu0 0.0
    %538 = vmatpush2.msra.mxu0 %v477
    %539 = vmatprep.subr.mxu0 0.0
    %540 = vmatpush2.msra.mxu0 %v476
    %541 = vmatprep.subr.mxu0 0.0
    %542 = vmatpush2.msra.mxu0 %v475
    %543 = vmatprep.subr.mxu0 0.0
    %544 = vmatpush2.msra.mxu0 %v474
    %545 = vmatprep.subr.mxu0 0.0
    %546 = vmatpush2.msra.mxu0 %v473
    %547 = vmatprep.subr.mxu0 0.0
    %548 = vmatpush2.msra.mxu0 %v472
    %549 = vmatprep.subr.mxu0 0.0
    %550 = vmatpush2.msra.mxu0 %v471
    %551 = vmatprep.subr.mxu0 0.0
    %552 = vmatpush2.msra.mxu0 %v470
    %553 = vmatprep.mubr.f32.mxu0 %v487
    %554 = vmatmul.mubr.f32.gmra.mxu0 %v452
    %v555 = vpop.f32.mrf.mxu0
    %v556 = vadd.f32 %v483, %v555
    %v557 = vpop.f32.mrf.mxu0
    %558 = vdwg.mxu0
    %v559 = vmax.f32 %v556, 0.0
    %v560 = vld [vmem:[%s11] sm:$0xff]
    %v561 = vld [vmem:[%s11 + $0x8] sm:$0xff]
    %v562 = vld [vmem:[%s11 + $0x10] sm:$0xff]
    %v563 = vld [vmem:[%s11 + $0x18] sm:$0xff]
    %v564 = vld [vmem:[#allocation8] sm:$0x1]
    %v566 = vlaneseq
    %v567 = vshrl.u32 %v566, 7
    %v568 = vsub.s32 0, %v567
    %v569 = vrot.slane %v564, %v568
    %571 = vmatprep.subr.mxu0 0.0
    %572 = vmatpush1.msra.mxu0 0.0
    %573 = vmatprep.subr.mxu0 0.0
    %574 = vmatpush1.msra.mxu0 0.0
    %575 = vmatprep.subr.mxu0 0.0
    %576 = vmatpush1.msra.mxu0 0.0
    %577 = vmatprep.subr.mxu0 0.0
    %578 = vmatpush1.msra.mxu0 0.0
    %579 = vmatprep.subr.mxu0 0.0
    %580 = vmatpush1.msra.mxu0 0.0
    %581 = vmatprep.subr.mxu0 0.0
    %582 = vmatpush1.msra.mxu0 0.0
    %583 = vmatprep.subr.mxu0 0.0
    %584 = vmatpush1.msra.mxu0 0.0
    %585 = vmatprep.subr.mxu0 0.0
    %586 = vmatpush1.msra.mxu0 0.0
    %587 = vmatprep.subr.mxu0 0.0
    %588 = vmatpush1.msra.mxu0 0.0
    %589 = vmatprep.subr.mxu0 0.0
    %590 = vmatpush1.msra.mxu0 0.0
    %591 = vmatprep.subr.mxu0 0.0
    %592 = vmatpush1.msra.mxu0 0.0
    %593 = vmatprep.subr.mxu0 0.0
    %594 = vmatpush1.msra.mxu0 0.0
    %595 = vmatprep.subr.mxu0 0.0
    %596 = vmatpush1.msra.mxu0 %v563
    %597 = vmatprep.subr.mxu0 0.0
    %598 = vmatpush1.msra.mxu0 %v562
    %599 = vmatprep.subr.mxu0 0.0
    %600 = vmatpush1.msra.mxu0 %v561
    %601 = vmatprep.subr.mxu0 0.0
    %602 = vmatpush1.msra.mxu0 %v560
    %603 = vmatprep.subr.mxu0 0.0
    %604 = vmatpush2.msra.mxu0 0.0
    %605 = vmatprep.subr.mxu0 0.0
    %606 = vmatpush2.msra.mxu0 0.0
    %607 = vmatprep.subr.mxu0 0.0
    %608 = vmatpush2.msra.mxu0 0.0
    %609 = vmatprep.subr.mxu0 0.0
    %610 = vmatpush2.msra.mxu0 0.0
    %611 = vmatprep.subr.mxu0 0.0
    %612 = vmatpush2.msra.mxu0 0.0
    %613 = vmatprep.subr.mxu0 0.0
    %614 = vmatpush2.msra.mxu0 0.0
    %615 = vmatprep.subr.mxu0 0.0
    %616 = vmatpush2.msra.mxu0 0.0
    %617 = vmatprep.subr.mxu0 0.0
    %618 = vmatpush2.msra.mxu0 0.0
    %619 = vmatprep.subr.mxu0 0.0
    %620 = vmatpush2.msra.mxu0 0.0
    %621 = vmatprep.subr.mxu0 0.0
    %622 = vmatpush2.msra.mxu0 0.0
    %623 = vmatprep.subr.mxu0 0.0
    %624 = vmatpush2.msra.mxu0 0.0
    %625 = vmatprep.subr.mxu0 0.0
    %626 = vmatpush2.msra.mxu0 0.0
    %627 = vmatprep.subr.mxu0 0.0
    %628 = vmatpush2.msra.mxu0 0.0
    %629 = vmatprep.subr.mxu0 0.0
    %630 = vmatpush2.msra.mxu0 0.0
    %631 = vmatprep.subr.mxu0 0.0
    %632 = vmatpush2.msra.mxu0 0.0
    %633 = vmatprep.subr.mxu0 0.0
    %634 = vmatpush2.msra.mxu0 0.0
    %635 = vmatprep.mubr.f32.mxu0 0.0
    %636 = vmatmul.mubr.f32.gmra.mxu0 %v379
    %v637 = vpop.f32.mrf.mxu0
    %v638 = vadd.f32 %v569, %v637
    %v639 = vpop.f32.mrf.mxu0
    %640 = vdwg.mxu0
    %vm641 = vcmask 23552
    %v642 = vsel %vm641, %v638, -inf
    %643 = vmax.xlane.f32.xlu0 %v642
    %v644 = vpop.xlane.xlu0 %643
    %v645 = vsub.f32 %v638, %v644
    %v646 = vmul.f32 %v645, 1.442695
    %v647 = vpow.pop %v646
    %v648 = vsel %vm641, %v647, 0.0
    %649 = vadd.xlane.f32.xlu0 %v648
    %v650 = vpop.xlane.xlu0 %649
    %v651 = vrcp.pop %v650
    %v652 = vmul.f32 %v647, %v651
    %vm653 = vcmask 48152
    %v654 = vsel %vm653, %v638, -inf
    %655 = vmax.xlane.f32.xlu0 %v654
    %v656 = vpop.xlane.xlu0 %655
    %v657 = vsub.f32 %v638, %v656
    %v658 = vmul.f32 %v657, 1.442695
    %v659 = vpow.pop %v658
    %661 = vrot.lane.b32.xlu0 %v659, 125
    %v662 = vpop.permute.xlu0 %661
    %v664 = vsel %vm641, %v662, 0.0
    %665 = vadd.xlane.f32.xlu0 %v664
    %v666 = vpop.xlane.xlu0 %665
    %v667 = vrcp.pop %v666
    %v668 = vmul.f32 %v659, %v667
    %670 = vset.pattern.permute.xlu0 0
    %671 = vperm.xlu0 %670, %v652
    %v672 = vpop.permute.xlu0 %671
    %v674 = vmul.f32 %v672, %v559
    %675 = vset.pattern.permute.xlu0 1
    %676 = vperm.xlu0 %675, %v652
    %v677 = vpop.permute.xlu0 %676
    %v679 = vmul.f32 %v677, %v559
    %681 = vrot.lane.b32.xlu0 %v679, 96
    %v682 = vpop.permute.xlu0 %681
    %v684 = vadd.f32 %v674, %v682
    %685 = vset.pattern.permute.xlu0 2
    %686 = vperm.xlu0 %685, %v652
    %v687 = vpop.permute.xlu0 %686
    %v689 = vmul.f32 %v687, %v559
    %691 = vrot.lane.b32.xlu0 %v689, 64
    %v692 = vpop.permute.xlu0 %691
    %v694 = vadd.f32 %v684, %v692
    %696 = vset.pattern.permute.xlu0 3
    %697 = vperm.xlu0 %696, %v668
    %v698 = vpop.permute.xlu0 %697
    %v700 = vmul.f32 %v698, %v559
    %701 = vset.pattern.permute.xlu0 4
    %702 = vperm.xlu0 %701, %v668
    %v703 = vpop.permute.xlu0 %702
    %v705 = vmul.f32 %v703, %v559
    %707 = vrot.lane.b32.xlu0 %v705, 96
    %v708 = vpop.permute.xlu0 %707
    %v710 = vadd.f32 %v700, %v708
    %711 = vset.pattern.permute.xlu0 5
    %712 = vperm.xlu0 %711, %v668
    %v713 = vpop.permute.xlu0 %712
    %v715 = vmul.f32 %v713, %v559
    %717 = vrot.lane.b32.xlu0 %v715, 64
    %v718 = vpop.permute.xlu0 %717
    %v720 = vadd.f32 %v710, %v718
    %722 = vrot.lane.b32.xlu0 %v720, 32
    %v723 = vpop.permute.xlu0 %722
    %v725 = vsel %vm377, %v694, %v723
    %v726 = vld [vmem:[#allocation10] sm:$0xff]
    %v727 = vld [vmem:[#allocation10 + $0x8] sm:$0xff]
    %v728 = vld [vmem:[#allocation10 + $0x10] sm:$0xff]
    %v729 = vld [vmem:[#allocation10 + $0x18] sm:$0xff]
    %v730 = vld [vmem:[#allocation10 + $0x20] sm:$0xff]
    %v731 = vld [vmem:[#allocation10 + $0x28] sm:$0xff]
    %v732 = vld [vmem:[#allocation10 + $0x30] sm:$0xff]
    %v733 = vld [vmem:[#allocation10 + $0x38] sm:$0xff]
    %v734 = vld [vmem:[#allocation11] sm:$0x1]
    %v736 = vlaneseq
    %v737 = vshrl.u32 %v736, 7
    %v738 = vsub.s32 0, %v737
    %v739 = vrot.slane %v734, %v738
    %v742 = vsel %vm485, %v725, 0
    %744 = vmatprep.subr.mxu0 0.0
    %745 = vmatpush1.msra.mxu0 0.0
    %746 = vmatprep.subr.mxu0 0.0
    %747 = vmatpush1.msra.mxu0 0.0
    %748 = vmatprep.subr.mxu0 0.0
    %749 = vmatpush1.msra.mxu0 0.0
    %750 = vmatprep.subr.mxu0 0.0
    %751 = vmatpush1.msra.mxu0 0.0
    %752 = vmatprep.subr.mxu0 0.0
    %753 = vmatpush1.msra.mxu0 0.0
    %754 = vmatprep.subr.mxu0 0.0
    %755 = vmatpush1.msra.mxu0 0.0
    %756 = vmatprep.subr.mxu0 0.0
    %757 = vmatpush1.msra.mxu0 0.0
    %758 = vmatprep.subr.mxu0 0.0
    %759 = vmatpush1.msra.mxu0 0.0
    %760 = vmatprep.subr.mxu0 0.0
    %761 = vmatpush1.msra.mxu0 %v733
    %762 = vmatprep.subr.mxu0 0.0
    %763 = vmatpush1.msra.mxu0 %v732
    %764 = vmatprep.subr.mxu0 0.0
    %765 = vmatpush1.msra.mxu0 %v731
    %766 = vmatprep.subr.mxu0 0.0
    %767 = vmatpush1.msra.mxu0 %v730
    %768 = vmatprep.subr.mxu0 0.0
    %769 = vmatpush1.msra.mxu0 %v729
    %770 = vmatprep.subr.mxu0 0.0
    %771 = vmatpush1.msra.mxu0 %v728
    %772 = vmatprep.subr.mxu0 0.0
    %773 = vmatpush1.msra.mxu0 %v727
    %774 = vmatprep.subr.mxu0 0.0
    %775 = vmatpush1.msra.mxu0 %v726
    %776 = vmatprep.subr.mxu0 0.0
    %777 = vmatpush2.msra.mxu0 0.0
    %778 = vmatprep.subr.mxu0 0.0
    %779 = vmatpush2.msra.mxu0 0.0
    %780 = vmatprep.subr.mxu0 0.0
    %781 = vmatpush2.msra.mxu0 0.0
    %782 = vmatprep.subr.mxu0 0.0
    %783 = vmatpush2.msra.mxu0 0.0
    %784 = vmatprep.subr.mxu0 0.0
    %785 = vmatpush2.msra.mxu0 0.0
    %786 = vmatprep.subr.mxu0 0.0
    %787 = vmatpush2.msra.mxu0 0.0
    %788 = vmatprep.subr.mxu0 0.0
    %789 = vmatpush2.msra.mxu0 0.0
    %790 = vmatprep.subr.mxu0 0.0
    %791 = vmatpush2.msra.mxu0 0.0
    %792 = vmatprep.subr.mxu0 0.0
    %793 = vmatpush2.msra.mxu0 0.0
    %794 = vmatprep.subr.mxu0 0.0
    %795 = vmatpush2.msra.mxu0 0.0
    %796 = vmatprep.subr.mxu0 0.0
    %797 = vmatpush2.msra.mxu0 0.0
    %798 = vmatprep.subr.mxu0 0.0
    %799 = vmatpush2.msra.mxu0 0.0
    %800 = vmatprep.subr.mxu0 0.0
    %801 = vmatpush2.msra.mxu0 0.0
    %802 = vmatprep.subr.mxu0 0.0
    %803 = vmatpush2.msra.mxu0 0.0
    %804 = vmatprep.subr.mxu0 0.0
    %805 = vmatpush2.msra.mxu0 0.0
    %806 = vmatprep.subr.mxu0 0.0
    %807 = vmatpush2.msra.mxu0 0.0
    %808 = vmatprep.mubr.f32.mxu0 0.0
    %809 = vmatmul.mubr.f32.gmra.mxu0 %v742
    %v810 = vpop.f32.mrf.mxu0
    %v811 = vadd.f32 %v739, %v810
    %v812 = vpop.f32.mrf.mxu0
    %813 = vdwg.mxu0
    %v814 = vmax.f32 %v811, 0.0
    %v815 = vld [vmem:[%s19] sm:$0xff]
    %v816 = vld [vmem:[%s19 + $0x8] sm:$0xff]
    %v817 = vld [vmem:[%s19 + $0x10] sm:$0xff]
    %v818 = vld [vmem:[%s19 + $0x18] sm:$0xff]
    %v819 = vld [vmem:[%s19 + $0x20] sm:$0xff]
    %v820 = vld [vmem:[%s19 + $0x28] sm:$0xff]
    %v821 = vld [vmem:[%s19 + $0x30] sm:$0xff]
    %v822 = vld [vmem:[%s19 + $0x38] sm:$0xff]
    %v823 = vld [vmem:[#allocation13] sm:$0x1]
    %v825 = vlaneseq
    %v826 = vshrl.u32 %v825, 7
    %v827 = vsub.s32 0, %v826
    %v828 = vrot.slane %v823, %v827
    %v831 = vsel %vm485, %v814, 0
    %833 = vmatprep.subr.mxu0 0.0
    %834 = vmatpush1.msra.mxu0 0.0
    %835 = vmatprep.subr.mxu0 0.0
    %836 = vmatpush1.msra.mxu0 0.0
    %837 = vmatprep.subr.mxu0 0.0
    %838 = vmatpush1.msra.mxu0 0.0
    %839 = vmatprep.subr.mxu0 0.0
    %840 = vmatpush1.msra.mxu0 0.0
    %841 = vmatprep.subr.mxu0 0.0
    %842 = vmatpush1.msra.mxu0 0.0
    %843 = vmatprep.subr.mxu0 0.0
    %844 = vmatpush1.msra.mxu0 0.0
    %845 = vmatprep.subr.mxu0 0.0
    %846 = vmatpush1.msra.mxu0 0.0
    %847 = vmatprep.subr.mxu0 0.0
    %848 = vmatpush1.msra.mxu0 0.0
    %849 = vmatprep.subr.mxu0 0.0
    %850 = vmatpush1.msra.mxu0 %v822
    %851 = vmatprep.subr.mxu0 0.0
    %852 = vmatpush1.msra.mxu0 %v821
    %853 = vmatprep.subr.mxu0 0.0
    %854 = vmatpush1.msra.mxu0 %v820
    %855 = vmatprep.subr.mxu0 0.0
    %856 = vmatpush1.msra.mxu0 %v819
    %857 = vmatprep.subr.mxu0 0.0
    %858 = vmatpush1.msra.mxu0 %v818
    %859 = vmatprep.subr.mxu0 0.0
    %860 = vmatpush1.msra.mxu0 %v817
    %861 = vmatprep.subr.mxu0 0.0
    %862 = vmatpush1.msra.mxu0 %v816
    %863 = vmatprep.subr.mxu0 0.0
    %864 = vmatpush1.msra.mxu0 %v815
    %865 = vmatprep.subr.mxu0 0.0
    %866 = vmatpush2.msra.mxu0 0.0
    %867 = vmatprep.subr.mxu0 0.0
    %868 = vmatpush2.msra.mxu0 0.0
    %869 = vmatprep.subr.mxu0 0.0
    %870 = vmatpush2.msra.mxu0 0.0
    %871 = vmatprep.subr.mxu0 0.0
    %872 = vmatpush2.msra.mxu0 0.0
    %873 = vmatprep.subr.mxu0 0.0
    %874 = vmatpush2.msra.mxu0 0.0
    %875 = vmatprep.subr.mxu0 0.0
    %876 = vmatpush2.msra.mxu0 0.0
    %877 = vmatprep.subr.mxu0 0.0
    %878 = vmatpush2.msra.mxu0 0.0
    %879 = vmatprep.subr.mxu0 0.0
    %880 = vmatpush2.msra.mxu0 0.0
    %881 = vmatprep.subr.mxu0 0.0
    %882 = vmatpush2.msra.mxu0 0.0
    %883 = vmatprep.subr.mxu0 0.0
    %884 = vmatpush2.msra.mxu0 0.0
    %885 = vmatprep.subr.mxu0 0.0
    %886 = vmatpush2.msra.mxu0 0.0
    %887 = vmatprep.subr.mxu0 0.0
    %888 = vmatpush2.msra.mxu0 0.0
    %889 = vmatprep.subr.mxu0 0.0
    %890 = vmatpush2.msra.mxu0 0.0
    %891 = vmatprep.subr.mxu0 0.0
    %892 = vmatpush2.msra.mxu0 0.0
    %893 = vmatprep.subr.mxu0 0.0
    %894 = vmatpush2.msra.mxu0 0.0
    %895 = vmatprep.subr.mxu0 0.0
    %896 = vmatpush2.msra.mxu0 0.0
    %897 = vmatprep.mubr.f32.mxu0 0.0
    %898 = vmatmul.mubr.f32.gmra.mxu0 %v831
    %v899 = vpop.f32.mrf.mxu0
    %v900 = vadd.f32 %v828, %v899
    %v901 = vpop.f32.mrf.mxu0
    %902 = vdwg.mxu0
    %v903 = vmax.f32 %v900, 0.0
    %v904 = vld [vmem:[%s23] sm:$0xff]
    %v905 = vld [vmem:[%s23 + $0x8] sm:$0xff]
    %v906 = vld [vmem:[%s23 + $0x10] sm:$0xff]
    %v907 = vld [vmem:[%s23 + $0x18] sm:$0xff]
    %v908 = vld [vmem:[#allocation14] sm:$0x1]
    %v910 = vlaneseq
    %v911 = vshrl.u32 %v910, 7
    %v912 = vsub.s32 0, %v911
    %v913 = vrot.slane %v908, %v912
    %v916 = vsel %vm377, %v903, 0
    %918 = vmatprep.subr.mxu0 0.0
    %919 = vmatpush1.msra.mxu0 0.0
    %920 = vmatprep.subr.mxu0 0.0
    %921 = vmatpush1.msra.mxu0 0.0
    %922 = vmatprep.subr.mxu0 0.0
    %923 = vmatpush1.msra.mxu0 0.0
    %924 = vmatprep.subr.mxu0 0.0
    %925 = vmatpush1.msra.mxu0 0.0
    %926 = vmatprep.subr.mxu0 0.0
    %927 = vmatpush1.msra.mxu0 0.0
    %928 = vmatprep.subr.mxu0 0.0
    %929 = vmatpush1.msra.mxu0 0.0
    %930 = vmatprep.subr.mxu0 0.0
    %931 = vmatpush1.msra.mxu0 0.0
    %932 = vmatprep.subr.mxu0 0.0
    %933 = vmatpush1.msra.mxu0 0.0
    %934 = vmatprep.subr.mxu0 0.0
    %935 = vmatpush1.msra.mxu0 0.0
    %936 = vmatprep.subr.mxu0 0.0
    %937 = vmatpush1.msra.mxu0 0.0
    %938 = vmatprep.subr.mxu0 0.0
    %939 = vmatpush1.msra.mxu0 0.0
    %940 = vmatprep.subr.mxu0 0.0
    %941 = vmatpush1.msra.mxu0 0.0
    %942 = vmatprep.subr.mxu0 0.0
    %943 = vmatpush1.msra.mxu0 %v907
    %944 = vmatprep.subr.mxu0 0.0
    %945 = vmatpush1.msra.mxu0 %v906
    %946 = vmatprep.subr.mxu0 0.0
    %947 = vmatpush1.msra.mxu0 %v905
    %948 = vmatprep.subr.mxu0 0.0
    %949 = vmatpush1.msra.mxu0 %v904
    %950 = vmatprep.subr.mxu0 0.0
    %951 = vmatpush2.msra.mxu0 0.0
    %952 = vmatprep.subr.mxu0 0.0
    %953 = vmatpush2.msra.mxu0 0.0
    %954 = vmatprep.subr.mxu0 0.0
    %955 = vmatpush2.msra.mxu0 0.0
    %956 = vmatprep.subr.mxu0 0.0
    %957 = vmatpush2.msra.mxu0 0.0
    %958 = vmatprep.subr.mxu0 0.0
    %959 = vmatpush2.msra.mxu0 0.0
    %960 = vmatprep.subr.mxu0 0.0
    %961 = vmatpush2.msra.mxu0 0.0
    %962 = vmatprep.subr.mxu0 0.0
    %963 = vmatpush2.msra.mxu0 0.0
    %964 = vmatprep.subr.mxu0 0.0
    %965 = vmatpush2.msra.mxu0 0.0
    %966 = vmatprep.subr.mxu0 0.0
    %967 = vmatpush2.msra.mxu0 0.0
    %968 = vmatprep.subr.mxu0 0.0
    %969 = vmatpush2.msra.mxu0 0.0
    %970 = vmatprep.subr.mxu0 0.0
    %971 = vmatpush2.msra.mxu0 0.0
    %972 = vmatprep.subr.mxu0 0.0
    %973 = vmatpush2.msra.mxu0 0.0
    %974 = vmatprep.subr.mxu0 0.0
    %975 = vmatpush2.msra.mxu0 0.0
    %976 = vmatprep.subr.mxu0 0.0
    %977 = vmatpush2.msra.mxu0 0.0
    %978 = vmatprep.subr.mxu0 0.0
    %979 = vmatpush2.msra.mxu0 0.0
    %980 = vmatprep.subr.mxu0 0.0
    %981 = vmatpush2.msra.mxu0 0.0
    %982 = vmatprep.mubr.f32.mxu0 0.0
    %983 = vmatmul.mubr.f32.gmra.mxu0 %v916
    %v984 = vpop.f32.mrf.mxu0
    %v985 = vadd.f32 %v913, %v984
    %v986 = vpop.f32.mrf.mxu0
    %987 = vdwg.mxu0
    %v988 = vxor.u32 %v985, 2147483648
    %v989 = vmul.f32 %v988, 1.442695
    %v990 = vpow.pop %v989
    %v991 = vadd.f32 %v990, 1.0
    %v992 = vrcp.pop %v991
    %v993 = vmul.f32 1.0, %v992
    %v994 = vld [vmem:[#allocation16] sm:$0x3]
    %996 = vset.pattern.permute.xlu0 0
    %997 = vperm.xlu0 %996, %v993
    %v998 = vpop.permute.xlu0 %997
    %v1001 = vlaneseq
    %v1002 = vshrl.u32 %v1001, 7
    %v1003 = vsub.s32 0, %v1002
    %v1004 = vrot.slane %v994, %v1003
    %v1005 = vlaneseq
    %v1006 = vshrl.u32 %v1005, 7
    %v1007 = vsub.s32 1, %v1006
    %v1008 = vrot.slane %v994, %v1007
    %v1011 = vmul.f32 %v998, %v1004
    %v1012 = vmul.f32 %v998, %v1008
    %v1013 = vld [vmem:[#allocation17] sm:$0x3]
    %v1015 = vlaneseq
    %v1016 = vshrl.u32 %v1015, 7
    %v1017 = vsub.s32 0, %v1016
    %v1018 = vrot.slane %v1013, %v1017
    %v1019 = vlaneseq
    %v1020 = vshrl.u32 %v1019, 7
    %v1021 = vsub.s32 1, %v1020
    %v1022 = vrot.slane %v1013, %v1021
    %v1025 = vadd.f32 %v1011, %v1018
    %v1026 = vadd.f32 %v1012, %v1022
    %v1027 = vld [vmem:[#allocation19] sm:$0xff]
    %v1028 = vld [vmem:[#allocation19 + $0x8] sm:$0xff]
    %v1029 = vld [vmem:[#allocation19 + $0x10] sm:$0xff]
    %v1030 = vld [vmem:[#allocation19 + $0x18] sm:$0xff]
    %v1031 = vld [vmem:[#allocation19 + $0x20] sm:$0xff]
    %v1032 = vld [vmem:[#allocation19 + $0x28] sm:$0xff]
    %v1033 = vld [vmem:[#allocation19 + $0x30] sm:$0xff]
    %v1034 = vld [vmem:[#allocation19 + $0x38] sm:$0xff]
    %1035 = vmatprep.subr.mxu0 0.0
    %1036 = vmatpush1.msra.mxu0 0.0
    %1037 = vmatprep.subr.mxu0 0.0
    %1038 = vmatpush1.msra.mxu0 0.0
    %1039 = vmatprep.subr.mxu0 0.0
    %1040 = vmatpush1.msra.mxu0 0.0
    %1041 = vmatprep.subr.mxu0 0.0
    %1042 = vmatpush1.msra.mxu0 0.0
    %1043 = vmatprep.subr.mxu0 0.0
    %1044 = vmatpush1.msra.mxu0 0.0
    %1045 = vmatprep.subr.mxu0 0.0
    %1046 = vmatpush1.msra.mxu0 0.0
    %1047 = vmatprep.subr.mxu0 0.0
    %1048 = vmatpush1.msra.mxu0 0.0
    %1049 = vmatprep.subr.mxu0 0.0
    %1050 = vmatpush1.msra.mxu0 0.0
    %1051 = vmatprep.subr.mxu0 0.0
    %1052 = vmatpush1.msra.mxu0 0.0
    %1053 = vmatprep.subr.mxu0 0.0
    %1054 = vmatpush1.msra.mxu0 0.0
    %1055 = vmatprep.subr.mxu0 0.0
    %1056 = vmatpush1.msra.mxu0 0.0
    %1057 = vmatprep.subr.mxu0 0.0
    %1058 = vmatpush1.msra.mxu0 0.0
    %1059 = vmatprep.subr.mxu0 %v1034
    %1060 = vmatpush1.msra.mxu0 %v1033
    %1061 = vmatprep.subr.mxu0 %v1032
    %1062 = vmatpush1.msra.mxu0 %v1031
    %1063 = vmatprep.subr.mxu0 %v1030
    %1064 = vmatpush1.msra.mxu0 %v1029
    %1065 = vmatprep.subr.mxu0 %v1028
    %1066 = vmatpush1.msra.mxu0 %v1027
    %1067 = vmatprep.subr.mxu0 0.0
    %1068 = vmatpush2.msra.mxu0 0.0
    %1069 = vmatprep.subr.mxu0 0.0
    %1070 = vmatpush2.msra.mxu0 0.0
    %1071 = vmatprep.subr.mxu0 0.0
    %1072 = vmatpush2.msra.mxu0 0.0
    %1073 = vmatprep.subr.mxu0 0.0
    %1074 = vmatpush2.msra.mxu0 0.0
    %1075 = vmatprep.subr.mxu0 0.0
    %1076 = vmatpush2.msra.mxu0 0.0
    %1077 = vmatprep.subr.mxu0 0.0
    %1078 = vmatpush2.msra.mxu0 0.0
    %1079 = vmatprep.subr.mxu0 0.0
    %1080 = vmatpush2.msra.mxu0 0.0
    %1081 = vmatprep.subr.mxu0 0.0
    %1082 = vmatpush2.msra.mxu0 0.0
    %1083 = vmatprep.subr.mxu0 0.0
    %1084 = vmatpush2.msra.mxu0 0.0
    %1085 = vmatprep.subr.mxu0 0.0
    %1086 = vmatpush2.msra.mxu0 0.0
    %1087 = vmatprep.subr.mxu0 0.0
    %1088 = vmatpush2.msra.mxu0 0.0
    %1089 = vmatprep.subr.mxu0 0.0
    %1090 = vmatpush2.msra.mxu0 0.0
    %1091 = vmatprep.subr.mxu0 0.0
    %1092 = vmatpush2.msra.mxu0 0.0
    %1093 = vmatprep.subr.mxu0 0.0
    %1094 = vmatpush2.msra.mxu0 0.0
    %1095 = vmatprep.subr.mxu0 0.0
    %1096 = vmatpush2.msra.mxu0 0.0
    %1097 = vmatprep.subr.mxu0 0.0
    %1098 = vmatpush2.msra.mxu0 0.0
    %1099 = vmatprep.mubr.f32.mxu0 0.0
    %1100 = vmatmul.mubr.f32.gmra.mxu0 %v379
    %v1101 = vpop.f32.mrf.mxu0
    %v1102 = vadd.f32 0.0, %v1101
    %v1103 = vpop.f32.mrf.mxu0
    %v1104 = vadd.f32 0.0, %v1103
    %1105 = vdwg.mxu0
    %v1106 = vmul.f32 %v1102, %v1025
    %v1107 = vmul.f32 %v1104, %v1026
    %v1108 = vld [vmem:[%s33] sm:$0xff]
    %v1109 = vld [vmem:[%s33 + $0x8] sm:$0xff]
    %v1110 = vld [vmem:[%s33 + $0x10] sm:$0xff]
    %v1111 = vld [vmem:[%s33 + $0x18] sm:$0xff]
    %v1112 = vld [vmem:[%s33 + $0x20] sm:$0xff]
    %v1113 = vld [vmem:[%s33 + $0x28] sm:$0xff]
    %v1114 = vld [vmem:[%s33 + $0x30] sm:$0xff]
    %v1115 = vld [vmem:[%s33 + $0x38] sm:$0xff]
    %v1116 = vld [vmem:[%s33 + $0x40] sm:$0xff]
    %v1117 = vld [vmem:[%s33 + $0x48] sm:$0xff]
    %v1118 = vld [vmem:[%s33 + $0x50] sm:$0xff]
    %v1119 = vld [vmem:[%s33 + $0x58] sm:$0xff]
    %v1120 = vld [vmem:[%s33 + $0x60] sm:$0xff]
    %v1121 = vld [vmem:[%s33 + $0x68] sm:$0xff]
    %v1122 = vld [vmem:[%s33 + $0x70] sm:$0xff]
    %v1123 = vld [vmem:[%s33 + $0x78] sm:$0xff]
    %v1124 = vld [vmem:[%s33 + $0x80] sm:$0xff]
    %v1125 = vld [vmem:[%s33 + $0x88] sm:$0xff]
    %v1126 = vld [vmem:[%s33 + $0x90] sm:$0xff]
    %v1127 = vld [vmem:[%s33 + $0x98] sm:$0xff]
    %v1128 = vld [vmem:[%s33 + $0xa0] sm:$0xff]
    %v1129 = vld [vmem:[%s33 + $0xa8] sm:$0xff]
    %v1130 = vld [vmem:[%s33 + $0xb0] sm:$0xff]
    %v1131 = vld [vmem:[%s33 + $0xb8] sm:$0xff]
    %v1132 = vld [vmem:[%s33 + $0xc0] sm:$0xff]
    %v1133 = vld [vmem:[%s33 + $0xc8] sm:$0xff]
    %v1134 = vld [vmem:[%s33 + $0xd0] sm:$0xff]
    %v1135 = vld [vmem:[%s33 + $0xd8] sm:$0xff]
    %v1136 = vld [vmem:[%s33 + $0xe0] sm:$0xff]
    %v1137 = vld [vmem:[%s33 + $0xe8] sm:$0xff]
    %v1138 = vld [vmem:[%s33 + $0xf0] sm:$0xff]
    %v1139 = vld [vmem:[%s33 + $0xf8] sm:$0xff]
    %v1140 = vld [vmem:[%s33 + $0x100] sm:$0xff]
    %v1141 = vld [vmem:[%s33 + $0x108] sm:$0xff]
    %v1142 = vld [vmem:[%s33 + $0x110] sm:$0xff]
    %v1143 = vld [vmem:[%s33 + $0x118] sm:$0xff]
    %v1144 = vld [vmem:[%s33 + $0x120] sm:$0xff]
    %v1145 = vld [vmem:[%s33 + $0x128] sm:$0xff]
    %v1146 = vld [vmem:[%s33 + $0x130] sm:$0xff]
    %v1147 = vld [vmem:[%s33 + $0x138] sm:$0xff]
    %v1148 = vld [vmem:[#allocation20] sm:$0x3]
    %v1150 = vlaneseq
    %v1151 = vshrl.u32 %v1150, 7
    %v1152 = vsub.s32 0, %v1151
    %v1153 = vrot.slane %v1148, %v1152
    %v1154 = vlaneseq
    %v1155 = vshrl.u32 %v1154, 7
    %v1156 = vsub.s32 1, %v1155
    %v1157 = vrot.slane %v1148, %v1156
    %v1161 = vsel %vm377, %v1107, 0
    %1163 = vmatprep.subr.mxu0 %v1139
    %1164 = vmatpush1.msra.mxu0 %v1138
    %1165 = vmatprep.subr.mxu0 %v1137
    %1166 = vmatpush1.msra.mxu0 %v1136
    %1167 = vmatprep.subr.mxu0 %v1135
    %1168 = vmatpush1.msra.mxu0 %v1134
    %1169 = vmatprep.subr.mxu0 %v1133
    %1170 = vmatpush1.msra.mxu0 %v1132
    %1171 = vmatprep.subr.mxu0 %v1131
    %1172 = vmatpush1.msra.mxu0 %v1130
    %1173 = vmatprep.subr.mxu0 %v1129
    %1174 = vmatpush1.msra.mxu0 %v1128
    %1175 = vmatprep.subr.mxu0 %v1127
    %1176 = vmatpush1.msra.mxu0 %v1126
    %1177 = vmatprep.subr.mxu0 %v1125
    %1178 = vmatpush1.msra.mxu0 %v1124
    %1179 = vmatprep.subr.mxu0 %v1123
    %1180 = vmatpush1.msra.mxu0 %v1122
    %1181 = vmatprep.subr.mxu0 %v1121
    %1182 = vmatpush1.msra.mxu0 %v1120
    %1183 = vmatprep.subr.mxu0 %v1119
    %1184 = vmatpush1.msra.mxu0 %v1118
    %1185 = vmatprep.subr.mxu0 %v1117
    %1186 = vmatpush1.msra.mxu0 %v1116
    %1187 = vmatprep.subr.mxu0 %v1115
    %1188 = vmatpush1.msra.mxu0 %v1114
    %1189 = vmatprep.subr.mxu0 %v1113
    %1190 = vmatpush1.msra.mxu0 %v1112
    %1191 = vmatprep.subr.mxu0 %v1111
    %1192 = vmatpush1.msra.mxu0 %v1110
    %1193 = vmatprep.subr.mxu0 %v1109
    %1194 = vmatpush1.msra.mxu0 %v1108
    %1195 = vmatprep.subr.mxu0 0.0
    %1196 = vmatpush2.msra.mxu0 0.0
    %1197 = vmatprep.subr.mxu0 0.0
    %1198 = vmatpush2.msra.mxu0 0.0
    %1199 = vmatprep.subr.mxu0 0.0
    %1200 = vmatpush2.msra.mxu0 0.0
    %1201 = vmatprep.subr.mxu0 0.0
    %1202 = vmatpush2.msra.mxu0 0.0
    %1203 = vmatprep.subr.mxu0 0.0
    %1204 = vmatpush2.msra.mxu0 0.0
    %1205 = vmatprep.subr.mxu0 0.0
    %1206 = vmatpush2.msra.mxu0 0.0
    %1207 = vmatprep.subr.mxu0 0.0
    %1208 = vmatpush2.msra.mxu0 0.0
    %1209 = vmatprep.subr.mxu0 0.0
    %1210 = vmatpush2.msra.mxu0 0.0
    %1211 = vmatprep.subr.mxu0 0.0
    %1212 = vmatpush2.msra.mxu0 0.0
    %1213 = vmatprep.subr.mxu0 0.0
    %1214 = vmatpush2.msra.mxu0 0.0
    %1215 = vmatprep.subr.mxu0 0.0
    %1216 = vmatpush2.msra.mxu0 0.0
    %1217 = vmatprep.subr.mxu0 0.0
    %1218 = vmatpush2.msra.mxu0 0.0
    %1219 = vmatprep.subr.mxu0 %v1147
    %1220 = vmatpush2.msra.mxu0 %v1146
    %1221 = vmatprep.subr.mxu0 %v1145
    %1222 = vmatpush2.msra.mxu0 %v1144
    %1223 = vmatprep.subr.mxu0 %v1143
    %1224 = vmatpush2.msra.mxu0 %v1142
    %1225 = vmatprep.subr.mxu0 %v1141
    %1226 = vmatpush2.msra.mxu0 %v1140
    %1227 = vmatprep.mubr.f32.mxu0 %v1161
    %1228 = vmatmul.mubr.f32.gmra.mxu0 %v1106
    %v1229 = vpop.f32.mrf.mxu0
    %v1230 = vadd.f32 %v1153, %v1229
    %v1231 = vpop.f32.mrf.mxu0
    %v1232 = vadd.f32 %v1157, %v1231
    %1233 = vdwg.mxu0
    %v1234 = vmax.f32 %v1230, 0.0
    %v1235 = vmax.f32 %v1232, 0.0
    %v1236 = vld [vmem:[#allocation22] sm:$0xff]
    %v1237 = vld [vmem:[#allocation22 + $0x8] sm:$0xff]
    %v1238 = vld [vmem:[#allocation22 + $0x10] sm:$0xff]
    %v1239 = vld [vmem:[#allocation22 + $0x18] sm:$0xff]
    %v1240 = vld [vmem:[#allocation22 + $0x20] sm:$0xff]
    %v1241 = vld [vmem:[#allocation22 + $0x28] sm:$0xff]
    %v1242 = vld [vmem:[#allocation22 + $0x30] sm:$0xff]
    %v1243 = vld [vmem:[#allocation22 + $0x38] sm:$0xff]
    %v1244 = vld [vmem:[#allocation22 + $0x40] sm:$0xff]
    %v1245 = vld [vmem:[#allocation22 + $0x48] sm:$0xff]
    %v1246 = vld [vmem:[#allocation22 + $0x50] sm:$0xff]
    %v1247 = vld [vmem:[#allocation22 + $0x58] sm:$0xff]
    %v1248 = vld [vmem:[#allocation22 + $0x60] sm:$0xff]
    %v1249 = vld [vmem:[#allocation22 + $0x68] sm:$0xff]
    %v1250 = vld [vmem:[#allocation22 + $0x70] sm:$0xff]
    %v1251 = vld [vmem:[#allocation22 + $0x78] sm:$0xff]
    %v1252 = vld [vmem:[#allocation22 + $0x80] sm:$0xff]
    %v1253 = vld [vmem:[#allocation22 + $0x88] sm:$0xff]
    %v1254 = vld [vmem:[#allocation22 + $0x90] sm:$0xff]
    %v1255 = vld [vmem:[#allocation22 + $0x98] sm:$0xff]
    %v1256 = vld [vmem:[#allocation22 + $0xa0] sm:$0xff]
    %v1257 = vld [vmem:[#allocation22 + $0xa8] sm:$0xff]
    %v1258 = vld [vmem:[#allocation22 + $0xb0] sm:$0xff]
    %v1259 = vld [vmem:[#allocation22 + $0xb8] sm:$0xff]
    %v1260 = vld [vmem:[#allocation23] sm:$0x1]
    %v1262 = vlaneseq
    %v1263 = vshrl.u32 %v1262, 7
    %v1264 = vsub.s32 0, %v1263
    %v1265 = vrot.slane %v1260, %v1264
    %v1268 = vsel %vm485, %v1235, 0
    %1270 = vmatprep.subr.mxu0 0.0
    %1271 = vmatpush1.msra.mxu0 %v1251
    %1272 = vmatprep.subr.mxu0 0.0
    %1273 = vmatpush1.msra.mxu0 %v1250
    %1274 = vmatprep.subr.mxu0 0.0
    %1275 = vmatpush1.msra.mxu0 %v1249
    %1276 = vmatprep.subr.mxu0 0.0
    %1277 = vmatpush1.msra.mxu0 %v1248
    %1278 = vmatprep.subr.mxu0 0.0
    %1279 = vmatpush1.msra.mxu0 %v1247
    %1280 = vmatprep.subr.mxu0 0.0
    %1281 = vmatpush1.msra.mxu0 %v1246
    %1282 = vmatprep.subr.mxu0 0.0
    %1283 = vmatpush1.msra.mxu0 %v1245
    %1284 = vmatprep.subr.mxu0 0.0
    %1285 = vmatpush1.msra.mxu0 %v1244
    %1286 = vmatprep.subr.mxu0 0.0
    %1287 = vmatpush1.msra.mxu0 %v1243
    %1288 = vmatprep.subr.mxu0 0.0
    %1289 = vmatpush1.msra.mxu0 %v1242
    %1290 = vmatprep.subr.mxu0 0.0
    %1291 = vmatpush1.msra.mxu0 %v1241
    %1292 = vmatprep.subr.mxu0 0.0
    %1293 = vmatpush1.msra.mxu0 %v1240
    %1294 = vmatprep.subr.mxu0 0.0
    %1295 = vmatpush1.msra.mxu0 %v1239
    %1296 = vmatprep.subr.mxu0 0.0
    %1297 = vmatpush1.msra.mxu0 %v1238
    %1298 = vmatprep.subr.mxu0 0.0
    %1299 = vmatpush1.msra.mxu0 %v1237
    %1300 = vmatprep.subr.mxu0 0.0
    %1301 = vmatpush1.msra.mxu0 %v1236
    %1302 = vmatprep.subr.mxu0 0.0
    %1303 = vmatpush2.msra.mxu0 0.0
    %1304 = vmatprep.subr.mxu0 0.0
    %1305 = vmatpush2.msra.mxu0 0.0
    %1306 = vmatprep.subr.mxu0 0.0
    %1307 = vmatpush2.msra.mxu0 0.0
    %1308 = vmatprep.subr.mxu0 0.0
    %1309 = vmatpush2.msra.mxu0 0.0
    %1310 = vmatprep.subr.mxu0 0.0
    %1311 = vmatpush2.msra.mxu0 0.0
    %1312 = vmatprep.subr.mxu0 0.0
    %1313 = vmatpush2.msra.mxu0 0.0
    %1314 = vmatprep.subr.mxu0 0.0
    %1315 = vmatpush2.msra.mxu0 0.0
    %1316 = vmatprep.subr.mxu0 0.0
    %1317 = vmatpush2.msra.mxu0 0.0
    %1318 = vmatprep.subr.mxu0 0.0
    %1319 = vmatpush2.msra.mxu0 %v1259
    %1320 = vmatprep.subr.mxu0 0.0
    %1321 = vmatpush2.msra.mxu0 %v1258
    %1322 = vmatprep.subr.mxu0 0.0
    %1323 = vmatpush2.msra.mxu0 %v1257
    %1324 = vmatprep.subr.mxu0 0.0
    %1325 = vmatpush2.msra.mxu0 %v1256
    %1326 = vmatprep.subr.mxu0 0.0
    %1327 = vmatpush2.msra.mxu0 %v1255
    %1328 = vmatprep.subr.mxu0 0.0
    %1329 = vmatpush2.msra.mxu0 %v1254
    %1330 = vmatprep.subr.mxu0 0.0
    %1331 = vmatpush2.msra.mxu0 %v1253
    %1332 = vmatprep.subr.mxu0 0.0
    %1333 = vmatpush2.msra.mxu0 %v1252
    %1334 = vmatprep.mubr.f32.mxu0 %v1268
    %1335 = vmatmul.mubr.f32.gmra.mxu0 %v1234
    %v1336 = vpop.f32.mrf.mxu0
    %v1337 = vadd.f32 %v1265, %v1336
    %v1338 = vpop.f32.mrf.mxu0
    %1339 = vdwg.mxu0
    %v1340 = vmax.f32 %v1337, 0.0
    %v1341 = vld [vmem:[%s41] sm:$0xff]
    %v1342 = vld [vmem:[%s41 + $0x8] sm:$0xff]
    %v1343 = vld [vmem:[%s41 + $0x10] sm:$0xff]
    %v1344 = vld [vmem:[%s41 + $0x18] sm:$0xff]
    %v1345 = vld [vmem:[%s41 + $0x20] sm:$0xff]
    %v1346 = vld [vmem:[%s41 + $0x28] sm:$0xff]
    %v1347 = vld [vmem:[%s41 + $0x30] sm:$0xff]
    %v1348 = vld [vmem:[%s41 + $0x38] sm:$0xff]
    %v1349 = vld [vmem:[%s41 + $0x40] sm:$0xff]
    %v1350 = vld [vmem:[%s41 + $0x48] sm:$0xff]
    %v1351 = vld [vmem:[%s41 + $0x50] sm:$0xff]
    %v1352 = vld [vmem:[%s41 + $0x58] sm:$0xff]
    %v1353 = vld [vmem:[%s41 + $0x60] sm:$0xff]
    %v1354 = vld [vmem:[%s41 + $0x68] sm:$0xff]
    %v1355 = vld [vmem:[%s41 + $0x70] sm:$0xff]
    %v1356 = vld [vmem:[%s41 + $0x78] sm:$0xff]
    %v1357 = vld [vmem:[%s41 + $0x80] sm:$0xff]
    %v1358 = vld [vmem:[%s41 + $0x88] sm:$0xff]
    %v1359 = vld [vmem:[%s41 + $0x90] sm:$0xff]
    %v1360 = vld [vmem:[%s41 + $0x98] sm:$0xff]
    %v1361 = vld [vmem:[#allocation25] sm:$0x1]
    %v1363 = vlaneseq
    %v1364 = vshrl.u32 %v1363, 7
    %v1365 = vsub.s32 0, %v1364
    %v1366 = vrot.slane %v1361, %v1365
    %1368 = vmatprep.subr.mxu0 0.0
    %1369 = vmatpush1.msra.mxu0 %v1356
    %1370 = vmatprep.subr.mxu0 0.0
    %1371 = vmatpush1.msra.mxu0 %v1355
    %1372 = vmatprep.subr.mxu0 0.0
    %1373 = vmatpush1.msra.mxu0 %v1354
    %1374 = vmatprep.subr.mxu0 0.0
    %1375 = vmatpush1.msra.mxu0 %v1353
    %1376 = vmatprep.subr.mxu0 0.0
    %1377 = vmatpush1.msra.mxu0 %v1352
    %1378 = vmatprep.subr.mxu0 0.0
    %1379 = vmatpush1.msra.mxu0 %v1351
    %1380 = vmatprep.subr.mxu0 0.0
    %1381 = vmatpush1.msra.mxu0 %v1350
    %1382 = vmatprep.subr.mxu0 0.0
    %1383 = vmatpush1.msra.mxu0 %v1349
    %1384 = vmatprep.subr.mxu0 0.0
    %1385 = vmatpush1.msra.mxu0 %v1348
    %1386 = vmatprep.subr.mxu0 0.0
    %1387 = vmatpush1.msra.mxu0 %v1347
    %1388 = vmatprep.subr.mxu0 0.0
    %1389 = vmatpush1.msra.mxu0 %v1346
    %1390 = vmatprep.subr.mxu0 0.0
    %1391 = vmatpush1.msra.mxu0 %v1345
    %1392 = vmatprep.subr.mxu0 0.0
    %1393 = vmatpush1.msra.mxu0 %v1344
    %1394 = vmatprep.subr.mxu0 0.0
    %1395 = vmatpush1.msra.mxu0 %v1343
    %1396 = vmatprep.subr.mxu0 0.0
    %1397 = vmatpush1.msra.mxu0 %v1342
    %1398 = vmatprep.subr.mxu0 0.0
    %1399 = vmatpush1.msra.mxu0 %v1341
    %1400 = vmatprep.subr.mxu0 0.0
    %1401 = vmatpush2.msra.mxu0 0.0
    %1402 = vmatprep.subr.mxu0 0.0
    %1403 = vmatpush2.msra.mxu0 0.0
    %1404 = vmatprep.subr.mxu0 0.0
    %1405 = vmatpush2.msra.mxu0 0.0
    %1406 = vmatprep.subr.mxu0 0.0
    %1407 = vmatpush2.msra.mxu0 0.0
    %1408 = vmatprep.subr.mxu0 0.0
    %1409 = vmatpush2.msra.mxu0 0.0
    %1410 = vmatprep.subr.mxu0 0.0
    %1411 = vmatpush2.msra.mxu0 0.0
    %1412 = vmatprep.subr.mxu0 0.0
    %1413 = vmatpush2.msra.mxu0 0.0
    %1414 = vmatprep.subr.mxu0 0.0
    %1415 = vmatpush2.msra.mxu0 0.0
    %1416 = vmatprep.subr.mxu0 0.0
    %1417 = vmatpush2.msra.mxu0 0.0
    %1418 = vmatprep.subr.mxu0 0.0
    %1419 = vmatpush2.msra.mxu0 0.0
    %1420 = vmatprep.subr.mxu0 0.0
    %1421 = vmatpush2.msra.mxu0 0.0
    %1422 = vmatprep.subr.mxu0 0.0
    %1423 = vmatpush2.msra.mxu0 0.0
    %1424 = vmatprep.subr.mxu0 0.0
    %1425 = vmatpush2.msra.mxu0 %v1360
    %1426 = vmatprep.subr.mxu0 0.0
    %1427 = vmatpush2.msra.mxu0 %v1359
    %1428 = vmatprep.subr.mxu0 0.0
    %1429 = vmatpush2.msra.mxu0 %v1358
    %1430 = vmatprep.subr.mxu0 0.0
    %1431 = vmatpush2.msra.mxu0 %v1357
    %1432 = vmatprep.mubr.f32.mxu0 %v1161
    %1433 = vmatmul.mubr.f32.gmra.mxu0 %v1106
    %v1434 = vpop.f32.mrf.mxu0
    %v1435 = vadd.f32 %v1366, %v1434
    %v1436 = vpop.f32.mrf.mxu0
    %1437 = vdwg.mxu0
    %v1438 = vsel %vm641, %v1435, -inf
    %1439 = vmax.xlane.f32.xlu0 %v1438
    %v1440 = vpop.xlane.xlu0 %1439
    %v1441 = vsub.f32 %v1435, %v1440
    %v1442 = vmul.f32 %v1441, 1.442695
    %v1443 = vpow.pop %v1442
    %v1444 = vsel %vm641, %v1443, 0.0
    %1445 = vadd.xlane.f32.xlu0 %v1444
    %v1446 = vpop.xlane.xlu0 %1445
    %v1447 = vrcp.pop %v1446
    %v1448 = vmul.f32 %v1443, %v1447
    %1450 = vset.pattern.permute.xlu0 0
    %1451 = vperm.xlu0 %1450, %v1448
    %v1452 = vpop.permute.xlu0 %1451
    %v1454 = vmul.f32 %v1452, %v1340
    %1455 = vset.pattern.permute.xlu0 1
    %1456 = vperm.xlu0 %1455, %v1448
    %v1457 = vpop.permute.xlu0 %1456
    %v1459 = vmul.f32 %v1457, %v1340
    %1461 = vrot.lane.b32.xlu0 %v1459, 96
    %v1462 = vpop.permute.xlu0 %1461
    %v1464 = vadd.f32 %v1454, %v1462
    %1465 = vset.pattern.permute.xlu0 2
    %1466 = vperm.xlu0 %1465, %v1448
    %v1467 = vpop.permute.xlu0 %1466
    %v1469 = vmul.f32 %v1467, %v1340
    %1471 = vrot.lane.b32.xlu0 %v1469, 64
    %v1472 = vpop.permute.xlu0 %1471
    %v1474 = vadd.f32 %v1464, %v1472
    %v1475 = vld [vmem:[#allocation26] sm:$0xff]
    %v1476 = vld [vmem:[#allocation26 + $0x8] sm:$0xff]
    %v1477 = vld [vmem:[#allocation26 + $0x10] sm:$0xff]
    %v1478 = vld [vmem:[#allocation26 + $0x18] sm:$0xff]
    %v1479 = vld [vmem:[#allocation28] sm:$0x1]
    %v1481 = vlaneseq
    %v1482 = vshrl.u32 %v1481, 7
    %v1483 = vsub.s32 0, %v1482
    %v1484 = vrot.slane %v1479, %v1483
    %v1487 = vsel %vm377, %v1474, 0
    %1489 = vmatprep.subr.mxu0 0.0
    %1490 = vmatpush1.msra.mxu0 0.0
    %1491 = vmatprep.subr.mxu0 0.0
    %1492 = vmatpush1.msra.mxu0 0.0
    %1493 = vmatprep.subr.mxu0 0.0
    %1494 = vmatpush1.msra.mxu0 0.0
    %1495 = vmatprep.subr.mxu0 0.0
    %1496 = vmatpush1.msra.mxu0 0.0
    %1497 = vmatprep.subr.mxu0 0.0
    %1498 = vmatpush1.msra.mxu0 0.0
    %1499 = vmatprep.subr.mxu0 0.0
    %1500 = vmatpush1.msra.mxu0 0.0
    %1501 = vmatprep.subr.mxu0 0.0
    %1502 = vmatpush1.msra.mxu0 0.0
    %1503 = vmatprep.subr.mxu0 0.0
    %1504 = vmatpush1.msra.mxu0 0.0
    %1505 = vmatprep.subr.mxu0 0.0
    %1506 = vmatpush1.msra.mxu0 0.0
    %1507 = vmatprep.subr.mxu0 0.0
    %1508 = vmatpush1.msra.mxu0 0.0
    %1509 = vmatprep.subr.mxu0 0.0
    %1510 = vmatpush1.msra.mxu0 0.0
    %1511 = vmatprep.subr.mxu0 0.0
    %1512 = vmatpush1.msra.mxu0 0.0
    %1513 = vmatprep.subr.mxu0 0.0
    %1514 = vmatpush1.msra.mxu0 %v1478
    %1515 = vmatprep.subr.mxu0 0.0
    %1516 = vmatpush1.msra.mxu0 %v1477
    %1517 = vmatprep.subr.mxu0 0.0
    %1518 = vmatpush1.msra.mxu0 %v1476
    %1519 = vmatprep.subr.mxu0 0.0
    %1520 = vmatpush1.msra.mxu0 %v1475
    %1521 = vmatprep.subr.mxu0 0.0
    %1522 = vmatpush2.msra.mxu0 0.0
    %1523 = vmatprep.subr.mxu0 0.0
    %1524 = vmatpush2.msra.mxu0 0.0
    %1525 = vmatprep.subr.mxu0 0.0
    %1526 = vmatpush2.msra.mxu0 0.0
    %1527 = vmatprep.subr.mxu0 0.0
    %1528 = vmatpush2.msra.mxu0 0.0
    %1529 = vmatprep.subr.mxu0 0.0
    %1530 = vmatpush2.msra.mxu0 0.0
    %1531 = vmatprep.subr.mxu0 0.0
    %1532 = vmatpush2.msra.mxu0 0.0
    %1533 = vmatprep.subr.mxu0 0.0
    %1534 = vmatpush2.msra.mxu0 0.0
    %1535 = vmatprep.subr.mxu0 0.0
    %1536 = vmatpush2.msra.mxu0 0.0
    %1537 = vmatprep.subr.mxu0 0.0
    %1538 = vmatpush2.msra.mxu0 0.0
    %1539 = vmatprep.subr.mxu0 0.0
    %1540 = vmatpush2.msra.mxu0 0.0
    %1541 = vmatprep.subr.mxu0 0.0
    %1542 = vmatpush2.msra.mxu0 0.0
    %1543 = vmatprep.subr.mxu0 0.0
    %1544 = vmatpush2.msra.mxu0 0.0
    %1545 = vmatprep.subr.mxu0 0.0
    %1546 = vmatpush2.msra.mxu0 0.0
    %1547 = vmatprep.subr.mxu0 0.0
    %1548 = vmatpush2.msra.mxu0 0.0
    %1549 = vmatprep.subr.mxu0 0.0
    %1550 = vmatpush2.msra.mxu0 0.0
    %1551 = vmatprep.subr.mxu0 0.0
    %1552 = vmatpush2.msra.mxu0 0.0
    %1553 = vmatprep.mubr.f32.mxu0 0.0
    %1554 = vmatmul.mubr.f32.gmra.mxu0 %v1487
    %v1555 = vpop.f32.mrf.mxu0
    %v1556 = vadd.f32 %v1484, %v1555
    %v1557 = vpop.f32.mrf.mxu0
    %1558 = vdwg.mxu0
    %v1559 = vmax.f32 %v1556, 0.0
    %v1560 = vld [vmem:[%s49] sm:$0xff]
    %v1561 = vld [vmem:[%s49 + $0x8] sm:$0xff]
    %v1562 = vld [vmem:[%s49 + $0x10] sm:$0xff]
    %v1563 = vld [vmem:[%s49 + $0x18] sm:$0xff]
    %v1564 = vld [vmem:[#allocation29] sm:$0x1]
    %v1566 = vlaneseq
    %v1567 = vshrl.u32 %v1566, 7
    %v1568 = vsub.s32 0, %v1567
    %v1569 = vrot.slane %v1564, %v1568
    %v1572 = vsel %vm377, %v1559, 0
    %1574 = vmatprep.subr.mxu0 0.0
    %1575 = vmatpush1.msra.mxu0 0.0
    %1576 = vmatprep.subr.mxu0 0.0
    %1577 = vmatpush1.msra.mxu0 0.0
    %1578 = vmatprep.subr.mxu0 0.0
    %1579 = vmatpush1.msra.mxu0 0.0
    %1580 = vmatprep.subr.mxu0 0.0
    %1581 = vmatpush1.msra.mxu0 0.0
    %1582 = vmatprep.subr.mxu0 0.0
    %1583 = vmatpush1.msra.mxu0 0.0
    %1584 = vmatprep.subr.mxu0 0.0
    %1585 = vmatpush1.msra.mxu0 0.0
    %1586 = vmatprep.subr.mxu0 0.0
    %1587 = vmatpush1.msra.mxu0 0.0
    %1588 = vmatprep.subr.mxu0 0.0
    %1589 = vmatpush1.msra.mxu0 0.0
    %1590 = vmatprep.subr.mxu0 0.0
    %1591 = vmatpush1.msra.mxu0 0.0
    %1592 = vmatprep.subr.mxu0 0.0
    %1593 = vmatpush1.msra.mxu0 0.0
    %1594 = vmatprep.subr.mxu0 0.0
    %1595 = vmatpush1.msra.mxu0 0.0
    %1596 = vmatprep.subr.mxu0 0.0
    %1597 = vmatpush1.msra.mxu0 0.0
    %1598 = vmatprep.subr.mxu0 0.0
    %1599 = vmatpush1.msra.mxu0 %v1563
    %1600 = vmatprep.subr.mxu0 0.0
    %1601 = vmatpush1.msra.mxu0 %v1562
    %1602 = vmatprep.subr.mxu0 0.0
    %1603 = vmatpush1.msra.mxu0 %v1561
    %1604 = vmatprep.subr.mxu0 0.0
    %1605 = vmatpush1.msra.mxu0 %v1560
    %1606 = vmatprep.subr.mxu0 0.0
    %1607 = vmatpush2.msra.mxu0 0.0
    %1608 = vmatprep.subr.mxu0 0.0
    %1609 = vmatpush2.msra.mxu0 0.0
    %1610 = vmatprep.subr.mxu0 0.0
    %1611 = vmatpush2.msra.mxu0 0.0
    %1612 = vmatprep.subr.mxu0 0.0
    %1613 = vmatpush2.msra.mxu0 0.0
    %1614 = vmatprep.subr.mxu0 0.0
    %1615 = vmatpush2.msra.mxu0 0.0
    %1616 = vmatprep.subr.mxu0 0.0
    %1617 = vmatpush2.msra.mxu0 0.0
    %1618 = vmatprep.subr.mxu0 0.0
    %1619 = vmatpush2.msra.mxu0 0.0
    %1620 = vmatprep.subr.mxu0 0.0
    %1621 = vmatpush2.msra.mxu0 0.0
    %1622 = vmatprep.subr.mxu0 0.0
    %1623 = vmatpush2.msra.mxu0 0.0
    %1624 = vmatprep.subr.mxu0 0.0
    %1625 = vmatpush2.msra.mxu0 0.0
    %1626 = vmatprep.subr.mxu0 0.0
    %1627 = vmatpush2.msra.mxu0 0.0
    %1628 = vmatprep.subr.mxu0 0.0
    %1629 = vmatpush2.msra.mxu0 0.0
    %1630 = vmatprep.subr.mxu0 0.0
    %1631 = vmatpush2.msra.mxu0 0.0
    %1632 = vmatprep.subr.mxu0 0.0
    %1633 = vmatpush2.msra.mxu0 0.0
    %1634 = vmatprep.subr.mxu0 0.0
    %1635 = vmatpush2.msra.mxu0 0.0
    %1636 = vmatprep.subr.mxu0 0.0
    %1637 = vmatpush2.msra.mxu0 0.0
    %1638 = vmatprep.mubr.f32.mxu0 0.0
    %1639 = vmatmul.mubr.f32.gmra.mxu0 %v1572
    %v1640 = vpop.f32.mrf.mxu0
    %v1641 = vadd.f32 %v1569, %v1640
    %v1642 = vpop.f32.mrf.mxu0
    %1643 = vdwg.mxu0
    %v1644 = vmax.f32 %v1641, 0.0
    %v1645 = vld [vmem:[#allocation31] sm:$0x1]
    %v1647 = vlaneseq
    %v1648 = vshrl.u32 %v1647, 7
    %v1649 = vsub.s32 0, %v1648
    %v1650 = vrot.slane %v1645, %v1649
    %v1652 = vmul.f32 %v1644, %v1650
    %vm1653 = vcmask 130048
    %v1654 = vsel %vm1653, %v1652, 0.0
    %1655 = vadd.xlane.f32.xlu0 %v1654
    %v1656 = vpop.xlane.xlu0 %1655
    %v1657 = vld [vmem:[#allocation2] sm:$0x1]
    %v1659 = vlaneseq
    %v1660 = vshrl.u32 %v1659, 7
    %v1661 = vsub.s32 0, %v1660
    %v1662 = vrot.slane %v1657, %v1661
    %v1664 = vadd.f32 %v1656, %v1662
    %v1665 = vxor.u32 %v1664, 2147483648
    %v1666 = vmul.f32 %v1665, 1.442695
    %v1667 = vpow.pop %v1666
    %v1668 = vadd.f32 %v1667, 1.0
    %v1669 = vrcp.pop %v1668
    %v1670 = vmul.f32 1.0, %v1669
    %1672 = vrot.lane.b32.xlu0 %v1670, 2
    %v1673 = vpop.permute.xlu0 %1672
    %vm1675 = vcmask 15360
    %v1676 = vsel %vm1675, %v993, %v1673
    %1677 = vst.msk [vmem:[%s57] sm:$0xff] %vm641, %v1676
    %1678 = vrot.lane.b32.xlu0 %v1474, 64
    %v1679 = vpop.permute.xlu0 %1678
    %v1681 = vsel %vm485, %v725, %v1679
    %vm1682 = vcmask 785408
    %1683 = vst.msk [vmem:[%s59] sm:$0xff] %vm1682, %v1681
    %1684 = vrot.lane.b32.xlu0 %v1559, 64
    %v1685 = vpop.permute.xlu0 %1684
    %v1687 = vsel %vm485, %v814, %v1685
    %1688 = vst.msk [vmem:[%s61] sm:$0xff] %vm1682, %v1687
    %1690 = vrot.lane.b32.xlu0 %v1644, 32
    %v1691 = vpop.permute.xlu0 %1690
    %v1693 = vsel %vm377, %v903, %v1691
    %vm1694 = vcmask 392192
    %1695 = vst.msk [vmem:[%s63] sm:$0xff] %vm1694, %v1693
    // Predicated region
    $region190: #{forward.1} parent=1 // pred_check
      _
    $region191: #{forward.1} parent=1 // pred_check_branch
      %1697 = sbr.rel (0) target = $region193
    $region192: #{forward.1} parent=1 // pred_region
      _
    $region193: #{forward.1} parent=1 // pred_fallthru
      _
    // Predicated region
    $region194: #{forward.1} parent=1 // pred_check
      _
    $region195: #{forward.1} parent=1 // pred_check_branch
      %1699 = sbr.rel (0) target = $region197
    $region196: #{forward.1} parent=1 // pred_region
      _
    $region197: #{forward.1} parent=1 // pred_fallthru
      _
    // Predicated region
    $region198: #{forward.1} parent=1 // pred_check
      _
    $region199: #{forward.1} parent=1 // pred_check_branch
      %1701 = sbr.rel (0) target = $region201
    $region200: #{forward.1} parent=1 // pred_region
      _
    $region201: #{forward.1} parent=1 // pred_fallthru
      _
    // Predicated region
    $region202: #{forward.1} parent=1 // pred_check
      _
    $region203: #{forward.1} parent=1 // pred_check_branch
      %1703 = sbr.rel (0) target = $region205
    $region204: #{forward.1} parent=1 // pred_region
      _
    $region205: #{forward.1} parent=1 // pred_fallthru
      _
    // Predicated region
    $region206: #{forward.1} parent=1 // pred_check
      _
    $region207: #{forward.1} parent=1 // pred_check_branch
      %1705 = sbr.rel (0) target = $region209
    $region208: #{forward.1} parent=1 // pred_region
      _
    $region209: #{forward.1} parent=1 // pred_fallthru
      _
    // Predicated region
    $region210: #{forward.1} parent=1 // pred_check
      _
    $region211: #{forward.1} parent=1 // pred_check_branch
      %1707 = sbr.rel (0) target = $region213
    $region212: #{forward.1} parent=1 // pred_region
      _
    $region213: #{forward.1} parent=1 // pred_fallthru
      _
    // Predicated region
    $region214: #{forward.1} parent=1 // pred_check
      _
    $region215: #{forward.1} parent=1 // pred_check_branch
      %1709 = sbr.rel (0) target = $region217
    $region216: #{forward.1} parent=1 // pred_region
      _
    $region217: #{forward.1} parent=1 // pred_fallthru
      _
    // Predicated region
    $region218: #{forward.1} parent=1 // pred_check
      _
    $region219: #{forward.1} parent=1 // pred_check_branch
      %1711 = sbr.rel (0) target = $region221
    $region220: #{forward.1} parent=1 // pred_region
      _
    $region221: #{forward.1} parent=1 // pred_fallthru
      _
    %1712 = vsyncpa [#allocation4], 1
    %1713 = vsyncpa [#allocation6], 1
    %1714 = vsyncpa [#allocation9], 1
    %1715 = vsyncpa [#allocation12], 1
    %1716 = vsyncpa [#allocation15], 1
    %1717 = vsyncpa [#allocation18], 1
    %1718 = vsyncpa [#allocation21], 1
    %1719 = vsyncpa [#allocation24], 1
    %1720 = vsyncpa [#allocation27], 1
    %1721 = vsyncpa [#allocation30], 1

</llo_original>
